<compile_context>
chip_gen: v5e
topology: v5e:2x2
jax: 0.10.0
libtpu: 0.0.40
codegen_flags: <defaults>
</compile_context>

<pallas_src>
import math

import jax
import jax.numpy as jnp
from jax.experimental import pallas as pl
from jax.experimental.pallas import tpu as pltpu

FEAT_DIM = 12288   # 3 * 64 * 64, hard-coded in the reference module


# ---------------------------------------------------------------------------
# Kernel: out_tile = feature @ W_tile^T + b_tile   (fused GEMM + bias on the MXU)
#   x_ref: (B, K) f32      w_ref: (TN, K) f32/bf16 (nn.Linear layout, no transpose)
#   b_ref: (1, TN) f32     o_ref: (B, TN) f32
# ---------------------------------------------------------------------------
def _fc_kernel(x_ref, w_ref, b_ref, o_ref):
    x = x_ref[...]
    w = w_ref[...]
    if x.dtype != w.dtype:
        # bf16-weight path: cast activations in-VMEM so the MXU runs native bf16.
        x = x.astype(w.dtype)
    acc = jax.lax.dot_general(
        x, w,
        dimension_numbers=(((1,), (1,)), ((), ())),   # contract K of both (trans_b)
        preferred_element_type=jnp.float32,
    )
    o_ref[...] = (acc + b_ref[...]).astype(o_ref.dtype)


def _pick_tile_n(n_cls):
    if n_cls <= 128:
        return n_cls      # one full-extent block; no padding, minimal HBM bytes
    if n_cls <= 256:
        return 128        # >= 2 grid steps so v7x's two TensorCores both get work
    return 256            # double-buffered (256, 12288) f32 tile is v7x-VMEM safe


def linear_pallas(feature, w, b, *, tile_n=None):
    """feature: (B, K) f32.  w: (num_classes, K) f32 or bf16.  b: (num_classes,) f32."""
    B, K = feature.shape
    n_cls, k_w = w.shape
    assert k_w == K, f"weight K mismatch: {k_w} vs {K}"
    if tile_n is None:
        tile_n = _pick_tile_n(n_cls)
    grid_n = pl.cdiv(n_cls, tile_n)
    b_row = b.astype(jnp.float32).reshape(1, n_cls)   # tiny (num_classes,) reshape

    return pl.pallas_call(
        _fc_kernel,
        out_shape=jax.ShapeDtypeStruct((B, n_cls), jnp.float32),
        grid_spec=pltpu.PrefetchScalarGridSpec(
            num_scalar_prefetch=0,
            grid=(grid_n,),
            in_specs=[
                pl.BlockSpec((B, K), lambda j: (0, 0)),        # activations, resident
                pl.BlockSpec((tile_n, K), lambda j: (j, 0)),   # weight rows, native layout
                pl.BlockSpec((1, tile_n), lambda j: (0, j)),   # bias tile
            ],
            out_specs=pl.BlockSpec((B, tile_n), lambda j: (0, j)),
        ),
        compiler_params=pltpu.CompilerParams(
            dimension_semantics=("parallel",),
            vmem_limit_bytes=40 * 1024 * 1024,
        ),
    )(feature, w, b_row)


# ---------------------------------------------------------------------------
# Full forward: feature = flatten(x) (identity feature), out = Linear(feature)
# ---------------------------------------------------------------------------
def mobilenet_v2_forward(x_nchw, params):
    B = x_nchw.shape[0]
    feature = x_nchw.reshape(B, -1)      # NCHW flatten == torch's .view(B, -1)
    assert feature.shape[1] == FEAT_DIM, (
        f"feat_dim mismatch: got {feature.shape[1]}, module hard-codes {FEAT_DIM} "
        f"(input must be (B, 3, 64, 64))")
    out = linear_pallas(feature, params["fc_w"], params["fc_b"])
    return feature, out


# ---------------------------------------------------------------------------
# Deterministic parameter construction (shapes match nn.Linear(12288, num_classes)).
# Weights are stored once in their final layout/dtype: nothing is transposed, padded
# or cast on the per-call path.
# ---------------------------------------------------------------------------
def make_params(key, num_classes, *, weight_dtype=jnp.float32):
    kw, kb = jax.random.split(key)
    bound = 1.0 / math.sqrt(FEAT_DIM)    # PyTorch default Linear init range
    fc_w = jax.random.uniform(kw, (num_classes, FEAT_DIM), jnp.float32, -bound, bound)
    fc_b = jax.random.uniform(kb, (num_classes,), jnp.float32, -bound, bound)
    return dict(fc_w=fc_w.astype(weight_dtype), fc_b=fc_b)


if __name__ == "__main__":
    num_classes = 10
    key = jax.random.PRNGKey(0)
    kx, kp = jax.random.split(key)
    # feat_dim = 12288 = 3*64*64 forces a (B, 3, 64, 64) input; batch = 2.
    x = jax.random.normal(kx, (2, 3, 64, 64), jnp.float32)
    params = make_params(kp, num_classes)

    fwd = jax.jit(mobilenet_v2_forward)
    feature, out = fwd(x, params)
    jax.block_until_ready((feature, out))

    assert feature.shape == (2, FEAT_DIM) and out.shape == (2, num_classes)
    assert bool(jnp.all(jnp.isfinite(feature))) and bool(jnp.all(jnp.isfinite(out)))

    # Pure-JAX reference check of the Pallas linear head (f32 weights).
    ref_feat = x.reshape(2, -1)
    ref_out = ref_feat @ params["fc_w"].T + params["fc_b"]
    assert bool(jnp.allclose(feature, ref_feat))
    assert bool(jnp.allclose(out, ref_out, atol=1e-3, rtol=1e-3))

    # bf16 weight-streaming path (halves weight HBM bytes, f32 MXU accumulation).
    # Tolerance loosened per review since bf16 rounding changes numerics slightly.
    params_bf16 = dict(fc_w=params["fc_w"].astype(jnp.bfloat16), fc_b=params["fc_b"])
    _, out_bf16 = jax.jit(mobilenet_v2_forward)(x, params_bf16)
    out_bf16 = jax.block_until_ready(out_bf16)
    ref_bf16 = ref_feat @ params_bf16["fc_w"].astype(jnp.float32).T + params["fc_b"]
    assert out_bf16.shape == (2, num_classes)
    assert bool(jnp.allclose(out_bf16, ref_bf16, atol=2e-2, rtol=2e-2))

    print("KERNEL_OK")
</pallas_src>

<mosaic_0001>
module attributes {stable_mosaic.version = 11 : i64} {
  func.func @_fc_kernel(%arg0: i32, %arg1: memref<2x12288xf32, #tpu.memory_space<vmem>>, %arg2: memref<10x12288xf32, #tpu.memory_space<vmem>>, %arg3: memref<1x10xf32, #tpu.memory_space<vmem>>, %arg4: memref<2x10xf32, #tpu.memory_space<vmem>>) attributes {dimension_semantics = [#tpu.dimension_semantics<parallel>], iteration_bounds = array<i64: 1>, scalar_prefetch = 0 : i64, scratch_operands = 0 : i64, tpu.core_type = #tpu.core_type<tc>, window_params = [{pipeline_mode = #tpu.pipeline_mode<synchronous>, transform_indices = @transform_0, window_bounds = array<i64: 2, 12288>}, {transform_indices = @transform_1, window_bounds = array<i64: 10, 12288>}, {transform_indices = @transform_2, window_bounds = array<i64: 1, 10>}, {transform_indices = @transform_3, window_bounds = array<i64: 2, 10>}]} {
    %c0 = arith.constant 0 : index
    %c0_0 = arith.constant 0 : index
    %0 = vector.load %arg1[%c0, %c0_0] : memref<2x12288xf32, #tpu.memory_space<vmem>>, vector<2x12288xf32>
    %c0_1 = arith.constant 0 : index
    %c0_2 = arith.constant 0 : index
    %1 = vector.load %arg2[%c0_1, %c0_2] : memref<10x12288xf32, #tpu.memory_space<vmem>>, vector<10x12288xf32>
    %cst = arith.constant dense<0.000000e+00> : vector<2x10xf32>
    %2 = tpu.matmul %0, %1, %cst {dimension_numbers = #tpu.dot_dimension_numbers<[1], [1], [0], [0], [0, 0, 1, 0], [], []>} : vector<2x12288xf32>, vector<10x12288xf32>, vector<2x10xf32> -> vector<2x10xf32>
    %c0_3 = arith.constant 0 : index
    %c0_4 = arith.constant 0 : index
    %3 = vector.load %arg3[%c0_3, %c0_4] : memref<1x10xf32, #tpu.memory_space<vmem>>, vector<1x10xf32>
    %4 = vector.broadcast %3 : vector<1x10xf32> to vector<2x10xf32>
    %5 = arith.addf %2, %4 : vector<2x10xf32>
    %c0_5 = arith.constant 0 : index
    %c0_6 = arith.constant 0 : index
    %6 = vector.load %arg4[%c0_5, %c0_6] : memref<2x10xf32, #tpu.memory_space<vmem>>, vector<2x10xf32>
    tpu.vector_store %arg4[%c0_5, %c0_6], %5 {strides = array<i32>} : memref<2x10xf32, #tpu.memory_space<vmem>>, vector<2x10xf32>,
    return
  }
  func.func @transform_0(%arg0: i32) -> (i32, i32) {
    %c0_i32 = arith.constant 0 : i32
    %c0_i32_0 = arith.constant 0 : i32
    %c0_i32_1 = arith.constant 0 : i32
    return %c0_i32, %c0_i32_0 : i32, i32
  }
  func.func @transform_1(%arg0: i32) -> (i32, i32) {
    %c0_i32 = arith.constant 0 : i32
    %c0_i32_0 = arith.constant 0 : i32
    return %arg0, %c0_i32 : i32, i32
  }
  func.func @transform_2(%arg0: i32) -> (i32, i32) {
    %c0_i32 = arith.constant 0 : i32
    %c0_i32_0 = arith.constant 0 : i32
    return %c0_i32, %arg0 : i32, i32
  }
  func.func @transform_3(%arg0: i32) -> (i32, i32) {
    %c0_i32 = arith.constant 0 : i32
    %c0_i32_0 = arith.constant 0 : i32
    return %c0_i32, %arg0 : i32, i32
  }
}

</mosaic_0001>

<llo_original>
// kernel: mobilenet_v2_forward.1
$region0: #{mobilenet_v2_forward.1}
  #allocation0 [shape = 'u32[]', space=smem, size = 0x4, offset = 0x4, fixed_abs, tag = 'smem constant byte address 0x4 - core index']
  #allocation1 [shape = 'u32[72,128]{1,0:T(1,128)}', space=vmem, size = 0x9000, scoped, tag = 'internal scratch']
  %s0 = inlined_call_operand.vmem [shape: f32[2,12288], index: 0, kind: input, shape index: {}]
  %s1 = inlined_call_operand.hbm [shape: f32[10,12288], index: 1, kind: input, shape index: {}]
  %s2 = inlined_call_operand.vmem [shape: f32[1,10], index: 2, kind: input, shape index: {}]
  %s3 = inlined_call_operand.hbm [shape: f32[2,10], index: 3, kind: output, shape index: {}]
  %s4 = sld [smem:[#allocation0]]
  $region26: #{mobilenet_v2_forward.1} parent=0
    _
  %s6 = ssub.s32 1, %s4
  %s7 = scalar_select 0, %s6, %s4
  $region1: #{mobilenet_v2_forward.1} parent=0
    #allocation2 [shape = 'u8[786432]{0}', space=vmem, size = 0xc0000, scoped, tag = 'input window, operand 1, single buffered']
    #allocation3 [shape = 's32[1]{0}', space=sflag, size = 0x4, scoped, tag = 'scoped memory for mobilenet_v2_forward.1']
    #allocation4 [shape = 's32[1]{0}', space=sflag, size = 0x4, scoped, tag = 'scoped memory for mobilenet_v2_forward.1']
    #allocation5 [shape = 'u8[1024]{0}', space=vmem, size = 0x400, scoped, tag = 'output window, operand 0, single buffered']
    %8 = vsyncpa [#allocation3], 0
    %9 = vsyncpa [#allocation4], 0
    // Predicated region
    $region2: #{mobilenet_v2_forward.1} parent=1 // pred_check
      _
    $region3: #{mobilenet_v2_forward.1} parent=1 // pred_check_branch
      %11 = sbr.rel (0) target = $region5
    $region4: #{mobilenet_v2_forward.1} parent=1 // pred_region
      _
    $region5: #{mobilenet_v2_forward.1} parent=1 // pred_fallthru
      _
    // Predicated region
    $region6: #{mobilenet_v2_forward.1} parent=1 // pred_check
      _
    $region7: #{mobilenet_v2_forward.1} parent=1 // pred_check_branch
      %13 = sbr.rel (0) target = $region9
    $region8: #{mobilenet_v2_forward.1} parent=1 // pred_region
      %15 = vsyncadd [#allocation3], 0
      %s16 = sshll.u32 %s1, 4
      %s17 = int_to_ptr.hbm [resolvable:$true] %s16
      %s18 = sshll.u32 [#allocation2], 4
      %s19 = int_to_ptr.vmem [resolvable:$true] %s18
      %24 = dma.hbm_to_vmem [thread:$0]  %s17, 24576, %s19, [#allocation3], 12288, 12288, 768
    $region9: #{mobilenet_v2_forward.1} parent=1 // pred_fallthru
      _
    // Predicated region
    $region10: #{mobilenet_v2_forward.1} parent=1 // pred_check
      _
    $region11: #{mobilenet_v2_forward.1} parent=1 // pred_check_branch
      %26 = sbr.rel (0) target = $region13
    $region12: #{mobilenet_v2_forward.1} parent=1 // pred_region
      _
    $region13: #{mobilenet_v2_forward.1} parent=1 // pred_fallthru
      _
    // Predicated region
    $region14: #{mobilenet_v2_forward.1} parent=1 // pred_check
      _
    $region15: #{mobilenet_v2_forward.1} parent=1 // pred_check_branch
      %28 = sbr.rel (0) target = $region17
    $region16: #{mobilenet_v2_forward.1} parent=1 // pred_region
      %30 = dma.done [#allocation3], 24576
    $region17: #{mobilenet_v2_forward.1} parent=1 // pred_fallthru
      _
    %v31 = vld [vmem:[%s0] sm:$0xff]
    %v32 = vld [vmem:[%s0 + $0x8] sm:$0xff]
    %v33 = vld [vmem:[%s0 + $0x10] sm:$0xff]
    %v34 = vld [vmem:[%s0 + $0x18] sm:$0xff]
    %v35 = vld [vmem:[%s0 + $0x20] sm:$0xff]
    %v36 = vld [vmem:[%s0 + $0x28] sm:$0xff]
    %v37 = vld [vmem:[%s0 + $0x30] sm:$0xff]
    %v38 = vld [vmem:[%s0 + $0x38] sm:$0xff]
    %v39 = vld [vmem:[%s0 + $0x40] sm:$0xff]
    %v40 = vld [vmem:[%s0 + $0x48] sm:$0xff]
    %v41 = vld [vmem:[%s0 + $0x50] sm:$0xff]
    %v42 = vld [vmem:[%s0 + $0x58] sm:$0xff]
    %v43 = vld [vmem:[%s0 + $0x60] sm:$0xff]
    %v44 = vld [vmem:[%s0 + $0x68] sm:$0xff]
    %v45 = vld [vmem:[%s0 + $0x70] sm:$0xff]
    %v46 = vld [vmem:[%s0 + $0x78] sm:$0xff]
    %v47 = vld [vmem:[%s0 + $0x80] sm:$0xff]
    %v48 = vld [vmem:[%s0 + $0x88] sm:$0xff]
    %v49 = vld [vmem:[%s0 + $0x90] sm:$0xff]
    %v50 = vld [vmem:[%s0 + $0x98] sm:$0xff]
    %v51 = vld [vmem:[%s0 + $0xa0] sm:$0xff]
    %v52 = vld [vmem:[%s0 + $0xa8] sm:$0xff]
    %v53 = vld [vmem:[%s0 + $0xb0] sm:$0xff]
    %v54 = vld [vmem:[%s0 + $0xb8] sm:$0xff]
    %v55 = vld [vmem:[#allocation2] sm:$0xff]
    %v56 = vld [vmem:[#allocation2 + $0x8] sm:$0xff]
    %v57 = vld [vmem:[#allocation2 + $0x10] sm:$0xff]
    %v58 = vld [vmem:[#allocation2 + $0x18] sm:$0xff]
    %v59 = vld [vmem:[#allocation2 + $0x20] sm:$0xff]
    %v60 = vld [vmem:[#allocation2 + $0x28] sm:$0xff]
    %v61 = vld [vmem:[#allocation2 + $0x30] sm:$0xff]
    %v62 = vld [vmem:[#allocation2 + $0x38] sm:$0xff]
    %v63 = vld [vmem:[#allocation2 + $0x40] sm:$0xff]
    %v64 = vld [vmem:[#allocation2 + $0x48] sm:$0xff]
    %v65 = vld [vmem:[#allocation2 + $0x50] sm:$0xff]
    %v66 = vld [vmem:[#allocation2 + $0x58] sm:$0xff]
    %v67 = vld [vmem:[#allocation2 + $0x60] sm:$0xff]
    %v68 = vld [vmem:[#allocation2 + $0x68] sm:$0xff]
    %v69 = vld [vmem:[#allocation2 + $0x70] sm:$0xff]
    %v70 = vld [vmem:[#allocation2 + $0x78] sm:$0xff]
    %v71 = vld [vmem:[#allocation2 + $0x80] sm:$0xff]
    %v72 = vld [vmem:[#allocation2 + $0x88] sm:$0xff]
    %v73 = vld [vmem:[#allocation2 + $0x90] sm:$0xff]
    %v74 = vld [vmem:[#allocation2 + $0x98] sm:$0xff]
    %v75 = vld [vmem:[#allocation2 + $0xa0] sm:$0xff]
    %v76 = vld [vmem:[#allocation2 + $0xa8] sm:$0xff]
    %v77 = vld [vmem:[#allocation2 + $0xb0] sm:$0xff]
    %v78 = vld [vmem:[#allocation2 + $0xb8] sm:$0xff]
    %v79 = vld [vmem:[#allocation2 + $0xc0] sm:$0xff]
    %v80 = vld [vmem:[#allocation2 + $0xc8] sm:$0xff]
    %v81 = vld [vmem:[#allocation2 + $0xd0] sm:$0xff]
    %v82 = vld [vmem:[#allocation2 + $0xd8] sm:$0xff]
    %v83 = vld [vmem:[#allocation2 + $0xe0] sm:$0xff]
    %v84 = vld [vmem:[#allocation2 + $0xe8] sm:$0xff]
    %v85 = vld [vmem:[#allocation2 + $0xf0] sm:$0xff]
    %v86 = vld [vmem:[#allocation2 + $0xf8] sm:$0xff]
    %v87 = vld [vmem:[#allocation2 + $0x100] sm:$0xff]
    %v88 = vld [vmem:[#allocation2 + $0x108] sm:$0xff]
    %v89 = vld [vmem:[#allocation2 + $0x110] sm:$0xff]
    %v90 = vld [vmem:[#allocation2 + $0x118] sm:$0xff]
    %v91 = vld [vmem:[#allocation2 + $0x120] sm:$0xff]
    %v92 = vld [vmem:[#allocation2 + $0x128] sm:$0xff]
    %v93 = vld [vmem:[#allocation2 + $0x130] sm:$0xff]
    %v94 = vld [vmem:[#allocation2 + $0x138] sm:$0xff]
    %v95 = vld [vmem:[#allocation2 + $0x140] sm:$0xff]
    %v96 = vld [vmem:[#allocation2 + $0x148] sm:$0xff]
    %v97 = vld [vmem:[#allocation2 + $0x150] sm:$0xff]
    %v98 = vld [vmem:[#allocation2 + $0x158] sm:$0xff]
    %v99 = vld [vmem:[#allocation2 + $0x160] sm:$0xff]
    %v100 = vld [vmem:[#allocation2 + $0x168] sm:$0xff]
    %v101 = vld [vmem:[#allocation2 + $0x170] sm:$0xff]
    %v102 = vld [vmem:[#allocation2 + $0x178] sm:$0xff]
    %v103 = vld [vmem:[#allocation2 + $0x180] sm:$0xff]
    %v104 = vld [vmem:[#allocation2 + $0x188] sm:$0xff]
    %v105 = vld [vmem:[#allocation2 + $0x190] sm:$0xff]
    %v106 = vld [vmem:[#allocation2 + $0x198] sm:$0xff]
    %v107 = vld [vmem:[#allocation2 + $0x1a0] sm:$0xff]
    %v108 = vld [vmem:[#allocation2 + $0x1a8] sm:$0xff]
    %v109 = vld [vmem:[#allocation2 + $0x1b0] sm:$0xff]
    %v110 = vld [vmem:[#allocation2 + $0x1b8] sm:$0xff]
    %v111 = vld [vmem:[#allocation2 + $0x1c0] sm:$0xff]
    %v112 = vld [vmem:[#allocation2 + $0x1c8] sm:$0xff]
    %v113 = vld [vmem:[#allocation2 + $0x1d0] sm:$0xff]
    %v114 = vld [vmem:[#allocation2 + $0x1d8] sm:$0xff]
    %v115 = vld [vmem:[#allocation2 + $0x1e0] sm:$0xff]
    %v116 = vld [vmem:[#allocation2 + $0x1e8] sm:$0xff]
    %v117 = vld [vmem:[#allocation2 + $0x1f0] sm:$0xff]
    %v118 = vld [vmem:[#allocation2 + $0x1f8] sm:$0xff]
    %v119 = vld [vmem:[#allocation2 + $0x200] sm:$0xff]
    %v120 = vld [vmem:[#allocation2 + $0x208] sm:$0xff]
    %v121 = vld [vmem:[#allocation2 + $0x210] sm:$0xff]
    %v122 = vld [vmem:[#allocation2 + $0x218] sm:$0xff]
    %v123 = vld [vmem:[#allocation2 + $0x220] sm:$0xff]
    %v124 = vld [vmem:[#allocation2 + $0x228] sm:$0xff]
    %v125 = vld [vmem:[#allocation2 + $0x230] sm:$0xff]
    %v126 = vld [vmem:[#allocation2 + $0x238] sm:$0xff]
    %v127 = vld [vmem:[#allocation2 + $0x240] sm:$0xff]
    %v128 = vld [vmem:[#allocation2 + $0x248] sm:$0xff]
    %v129 = vld [vmem:[#allocation2 + $0x250] sm:$0xff]
    %v130 = vld [vmem:[#allocation2 + $0x258] sm:$0xff]
    %v131 = vld [vmem:[#allocation2 + $0x260] sm:$0xff]
    %v132 = vld [vmem:[#allocation2 + $0x268] sm:$0xff]
    %v133 = vld [vmem:[#allocation2 + $0x270] sm:$0xff]
    %v134 = vld [vmem:[#allocation2 + $0x278] sm:$0xff]
    %v135 = vld [vmem:[#allocation2 + $0x280] sm:$0xff]
    %v136 = vld [vmem:[#allocation2 + $0x288] sm:$0xff]
    %v137 = vld [vmem:[#allocation2 + $0x290] sm:$0xff]
    %v138 = vld [vmem:[#allocation2 + $0x298] sm:$0xff]
    %v139 = vld [vmem:[#allocation2 + $0x2a0] sm:$0xff]
    %v140 = vld [vmem:[#allocation2 + $0x2a8] sm:$0xff]
    %v141 = vld [vmem:[#allocation2 + $0x2b0] sm:$0xff]
    %v142 = vld [vmem:[#allocation2 + $0x2b8] sm:$0xff]
    %v143 = vld [vmem:[#allocation2 + $0x2c0] sm:$0xff]
    %v144 = vld [vmem:[#allocation2 + $0x2c8] sm:$0xff]
    %v145 = vld [vmem:[#allocation2 + $0x2d0] sm:$0xff]
    %v146 = vld [vmem:[#allocation2 + $0x2d8] sm:$0xff]
    %v147 = vld [vmem:[#allocation2 + $0x2e0] sm:$0xff]
    %v148 = vld [vmem:[#allocation2 + $0x2e8] sm:$0xff]
    %v149 = vld [vmem:[#allocation2 + $0x2f0] sm:$0xff]
    %v150 = vld [vmem:[#allocation2 + $0x2f8] sm:$0xff]
    %v151 = vld [vmem:[#allocation2 + $0x300] sm:$0x3]
    %v152 = vld [vmem:[#allocation2 + $0x308] sm:$0x3]
    %v153 = vld [vmem:[#allocation2 + $0x310] sm:$0x3]
    %v154 = vld [vmem:[#allocation2 + $0x318] sm:$0x3]
    %v155 = vld [vmem:[#allocation2 + $0x320] sm:$0x3]
    %v156 = vld [vmem:[#allocation2 + $0x328] sm:$0x3]
    %v157 = vld [vmem:[#allocation2 + $0x330] sm:$0x3]
    %v158 = vld [vmem:[#allocation2 + $0x338] sm:$0x3]
    %v159 = vld [vmem:[#allocation2 + $0x340] sm:$0x3]
    %v160 = vld [vmem:[#allocation2 + $0x348] sm:$0x3]
    %v161 = vld [vmem:[#allocation2 + $0x350] sm:$0x3]
    %v162 = vld [vmem:[#allocation2 + $0x358] sm:$0x3]
    %v163 = vld [vmem:[#allocation2 + $0x360] sm:$0x3]
    %v164 = vld [vmem:[#allocation2 + $0x368] sm:$0x3]
    %v165 = vld [vmem:[#allocation2 + $0x370] sm:$0x3]
    %v166 = vld [vmem:[#allocation2 + $0x378] sm:$0x3]
    %v167 = vld [vmem:[#allocation2 + $0x380] sm:$0x3]
    %v168 = vld [vmem:[#allocation2 + $0x388] sm:$0x3]
    %v169 = vld [vmem:[#allocation2 + $0x390] sm:$0x3]
    %v170 = vld [vmem:[#allocation2 + $0x398] sm:$0x3]
    %v171 = vld [vmem:[#allocation2 + $0x3a0] sm:$0x3]
    %v172 = vld [vmem:[#allocation2 + $0x3a8] sm:$0x3]
    %v173 = vld [vmem:[#allocation2 + $0x3b0] sm:$0x3]
    %v174 = vld [vmem:[#allocation2 + $0x3b8] sm:$0x3]
    %v175 = vld [vmem:[#allocation2 + $0x3c0] sm:$0x3]
    %v176 = vld [vmem:[#allocation2 + $0x3c8] sm:$0x3]
    %v177 = vld [vmem:[#allocation2 + $0x3d0] sm:$0x3]
    %v178 = vld [vmem:[#allocation2 + $0x3d8] sm:$0x3]
    %v179 = vld [vmem:[#allocation2 + $0x3e0] sm:$0x3]
    %v180 = vld [vmem:[#allocation2 + $0x3e8] sm:$0x3]
    %v181 = vld [vmem:[#allocation2 + $0x3f0] sm:$0x3]
    %v182 = vld [vmem:[#allocation2 + $0x3f8] sm:$0x3]
    %v183 = vld [vmem:[#allocation2 + $0x400] sm:$0x3]
    %v184 = vld [vmem:[#allocation2 + $0x408] sm:$0x3]
    %v185 = vld [vmem:[#allocation2 + $0x410] sm:$0x3]
    %v186 = vld [vmem:[#allocation2 + $0x418] sm:$0x3]
    %v187 = vld [vmem:[#allocation2 + $0x420] sm:$0x3]
    %v188 = vld [vmem:[#allocation2 + $0x428] sm:$0x3]
    %v189 = vld [vmem:[#allocation2 + $0x430] sm:$0x3]
    %v190 = vld [vmem:[#allocation2 + $0x438] sm:$0x3]
    %v191 = vld [vmem:[#allocation2 + $0x440] sm:$0x3]
    %v192 = vld [vmem:[#allocation2 + $0x448] sm:$0x3]
    %v193 = vld [vmem:[#allocation2 + $0x450] sm:$0x3]
    %v194 = vld [vmem:[#allocation2 + $0x458] sm:$0x3]
    %v195 = vld [vmem:[#allocation2 + $0x460] sm:$0x3]
    %v196 = vld [vmem:[#allocation2 + $0x468] sm:$0x3]
    %v197 = vld [vmem:[#allocation2 + $0x470] sm:$0x3]
    %v198 = vld [vmem:[#allocation2 + $0x478] sm:$0x3]
    %v199 = vld [vmem:[#allocation2 + $0x480] sm:$0x3]
    %v200 = vld [vmem:[#allocation2 + $0x488] sm:$0x3]
    %v201 = vld [vmem:[#allocation2 + $0x490] sm:$0x3]
    %v202 = vld [vmem:[#allocation2 + $0x498] sm:$0x3]
    %v203 = vld [vmem:[#allocation2 + $0x4a0] sm:$0x3]
    %v204 = vld [vmem:[#allocation2 + $0x4a8] sm:$0x3]
    %v205 = vld [vmem:[#allocation2 + $0x4b0] sm:$0x3]
    %v206 = vld [vmem:[#allocation2 + $0x4b8] sm:$0x3]
    %v207 = vld [vmem:[#allocation2 + $0x4c0] sm:$0x3]
    %v208 = vld [vmem:[#allocation2 + $0x4c8] sm:$0x3]
    %v209 = vld [vmem:[#allocation2 + $0x4d0] sm:$0x3]
    %v210 = vld [vmem:[#allocation2 + $0x4d8] sm:$0x3]
    %v211 = vld [vmem:[#allocation2 + $0x4e0] sm:$0x3]
    %v212 = vld [vmem:[#allocation2 + $0x4e8] sm:$0x3]
    %v213 = vld [vmem:[#allocation2 + $0x4f0] sm:$0x3]
    %v214 = vld [vmem:[#allocation2 + $0x4f8] sm:$0x3]
    %v215 = vld [vmem:[#allocation2 + $0x500] sm:$0x3]
    %v216 = vld [vmem:[#allocation2 + $0x508] sm:$0x3]
    %v217 = vld [vmem:[#allocation2 + $0x510] sm:$0x3]
    %v218 = vld [vmem:[#allocation2 + $0x518] sm:$0x3]
    %v219 = vld [vmem:[#allocation2 + $0x520] sm:$0x3]
    %v220 = vld [vmem:[#allocation2 + $0x528] sm:$0x3]
    %v221 = vld [vmem:[#allocation2 + $0x530] sm:$0x3]
    %v222 = vld [vmem:[#allocation2 + $0x538] sm:$0x3]
    %v223 = vld [vmem:[#allocation2 + $0x540] sm:$0x3]
    %v224 = vld [vmem:[#allocation2 + $0x548] sm:$0x3]
    %v225 = vld [vmem:[#allocation2 + $0x550] sm:$0x3]
    %v226 = vld [vmem:[#allocation2 + $0x558] sm:$0x3]
    %v227 = vld [vmem:[#allocation2 + $0x560] sm:$0x3]
    %v228 = vld [vmem:[#allocation2 + $0x568] sm:$0x3]
    %v229 = vld [vmem:[#allocation2 + $0x570] sm:$0x3]
    %v230 = vld [vmem:[#allocation2 + $0x578] sm:$0x3]
    %v231 = vld [vmem:[#allocation2 + $0x580] sm:$0x3]
    %v232 = vld [vmem:[#allocation2 + $0x588] sm:$0x3]
    %v233 = vld [vmem:[#allocation2 + $0x590] sm:$0x3]
    %v234 = vld [vmem:[#allocation2 + $0x598] sm:$0x3]
    %v235 = vld [vmem:[#allocation2 + $0x5a0] sm:$0x3]
    %v236 = vld [vmem:[#allocation2 + $0x5a8] sm:$0x3]
    %v237 = vld [vmem:[#allocation2 + $0x5b0] sm:$0x3]
    %v238 = vld [vmem:[#allocation2 + $0x5b8] sm:$0x3]
    %v239 = vld [vmem:[#allocation2 + $0x5c0] sm:$0x3]
    %v240 = vld [vmem:[#allocation2 + $0x5c8] sm:$0x3]
    %v241 = vld [vmem:[#allocation2 + $0x5d0] sm:$0x3]
    %v242 = vld [vmem:[#allocation2 + $0x5d8] sm:$0x3]
    %v243 = vld [vmem:[#allocation2 + $0x5e0] sm:$0x3]
    %v244 = vld [vmem:[#allocation2 + $0x5e8] sm:$0x3]
    %v245 = vld [vmem:[#allocation2 + $0x5f0] sm:$0x3]
    %v246 = vld [vmem:[#allocation2 + $0x5f8] sm:$0x3]
    %v247 = vld [vmem:[%s2] sm:$0x1]
    %v249 = vperm.slane %v247, 0
    %275 = vst [vmem:[#allocation1] ss:$4 sm:$0xff] %v31
    %s276 = scalar_lea.vmem [#allocation1], 32
    %277 = vst [vmem:[%s276] ss:$4 sm:$0xff] %v32
    %v278 = vld.sshfl [vmem:[#allocation1] sm:$0xff pattern:$0x73625140]
    %v279 = vld.sshfl [vmem:[#allocation1 + $0x8] sm:$0xff pattern:$0x73625140]
    %v280 = vld.sshfl [vmem:[#allocation1 + $0x10] sm:$0xff pattern:$0x73625140]
    %v281 = vld.sshfl [vmem:[#allocation1 + $0x18] sm:$0xff pattern:$0x73625140]
    %v282 = vld.sshfl [vmem:[#allocation1 + $0x20] sm:$0xff pattern:$0x73625140]
    %v283 = vld.sshfl [vmem:[#allocation1 + $0x28] sm:$0xff pattern:$0x73625140]
    %v284 = vld.sshfl [vmem:[#allocation1 + $0x30] sm:$0xff pattern:$0x73625140]
    %v285 = vld.sshfl [vmem:[#allocation1 + $0x38] sm:$0xff pattern:$0x73625140]
    %286 = vst [vmem:[#allocation1] ss:$4 sm:$0xff] %v33
    %287 = vst [vmem:[%s276] ss:$4 sm:$0xff] %v34
    %v288 = vld.sshfl [vmem:[#allocation1] sm:$0xff pattern:$0x73625140]
    %v289 = vld.sshfl [vmem:[#allocation1 + $0x8] sm:$0xff pattern:$0x73625140]
    %v290 = vld.sshfl [vmem:[#allocation1 + $0x10] sm:$0xff pattern:$0x73625140]
    %v291 = vld.sshfl [vmem:[#allocation1 + $0x18] sm:$0xff pattern:$0x73625140]
    %v292 = vld.sshfl [vmem:[#allocation1 + $0x20] sm:$0xff pattern:$0x73625140]
    %v293 = vld.sshfl [vmem:[#allocation1 + $0x28] sm:$0xff pattern:$0x73625140]
    %v294 = vld.sshfl [vmem:[#allocation1 + $0x30] sm:$0xff pattern:$0x73625140]
    %v295 = vld.sshfl [vmem:[#allocation1 + $0x38] sm:$0xff pattern:$0x73625140]
    %296 = vst [vmem:[#allocation1] ss:$4 sm:$0xff] %v35
    %297 = vst [vmem:[%s276] ss:$4 sm:$0xff] %v36
    %v298 = vld.sshfl [vmem:[#allocation1] sm:$0xff pattern:$0x73625140]
    %v299 = vld.sshfl [vmem:[#allocation1 + $0x8] sm:$0xff pattern:$0x73625140]
    %v300 = vld.sshfl [vmem:[#allocation1 + $0x10] sm:$0xff pattern:$0x73625140]
    %v301 = vld.sshfl [vmem:[#allocation1 + $0x18] sm:$0xff pattern:$0x73625140]
    %v302 = vld.sshfl [vmem:[#allocation1 + $0x20] sm:$0xff pattern:$0x73625140]
    %v303 = vld.sshfl [vmem:[#allocation1 + $0x28] sm:$0xff pattern:$0x73625140]
    %v304 = vld.sshfl [vmem:[#allocation1 + $0x30] sm:$0xff pattern:$0x73625140]
    %v305 = vld.sshfl [vmem:[#allocation1 + $0x38] sm:$0xff pattern:$0x73625140]
    %306 = vst [vmem:[#allocation1] ss:$4 sm:$0xff] %v37
    %307 = vst [vmem:[%s276] ss:$4 sm:$0xff] %v38
    %v308 = vld.sshfl [vmem:[#allocation1] sm:$0xff pattern:$0x73625140]
    %v309 = vld.sshfl [vmem:[#allocation1 + $0x8] sm:$0xff pattern:$0x73625140]
    %v310 = vld.sshfl [vmem:[#allocation1 + $0x10] sm:$0xff pattern:$0x73625140]
    %v311 = vld.sshfl [vmem:[#allocation1 + $0x18] sm:$0xff pattern:$0x73625140]
    %v312 = vld.sshfl [vmem:[#allocation1 + $0x20] sm:$0xff pattern:$0x73625140]
    %v313 = vld.sshfl [vmem:[#allocation1 + $0x28] sm:$0xff pattern:$0x73625140]
    %v314 = vld.sshfl [vmem:[#allocation1 + $0x30] sm:$0xff pattern:$0x73625140]
    %v315 = vld.sshfl [vmem:[#allocation1 + $0x38] sm:$0xff pattern:$0x73625140]
    %316 = vst [vmem:[#allocation1] ss:$4 sm:$0xff] %v39
    %317 = vst [vmem:[%s276] ss:$4 sm:$0xff] %v40
    %v318 = vld.sshfl [vmem:[#allocation1] sm:$0xff pattern:$0x73625140]
    %v319 = vld.sshfl [vmem:[#allocation1 + $0x8] sm:$0xff pattern:$0x73625140]
    %v320 = vld.sshfl [vmem:[#allocation1 + $0x10] sm:$0xff pattern:$0x73625140]
    %v321 = vld.sshfl [vmem:[#allocation1 + $0x18] sm:$0xff pattern:$0x73625140]
    %v322 = vld.sshfl [vmem:[#allocation1 + $0x20] sm:$0xff pattern:$0x73625140]
    %v323 = vld.sshfl [vmem:[#allocation1 + $0x28] sm:$0xff pattern:$0x73625140]
    %v324 = vld.sshfl [vmem:[#allocation1 + $0x30] sm:$0xff pattern:$0x73625140]
    %v325 = vld.sshfl [vmem:[#allocation1 + $0x38] sm:$0xff pattern:$0x73625140]
    %326 = vst [vmem:[#allocation1] ss:$4 sm:$0xff] %v41
    %327 = vst [vmem:[%s276] ss:$4 sm:$0xff] %v42
    %v328 = vld.sshfl [vmem:[#allocation1] sm:$0xff pattern:$0x73625140]
    %v329 = vld.sshfl [vmem:[#allocation1 + $0x8] sm:$0xff pattern:$0x73625140]
    %v330 = vld.sshfl [vmem:[#allocation1 + $0x10] sm:$0xff pattern:$0x73625140]
    %v331 = vld.sshfl [vmem:[#allocation1 + $0x18] sm:$0xff pattern:$0x73625140]
    %v332 = vld.sshfl [vmem:[#allocation1 + $0x20] sm:$0xff pattern:$0x73625140]
    %v333 = vld.sshfl [vmem:[#allocation1 + $0x28] sm:$0xff pattern:$0x73625140]
    %v334 = vld.sshfl [vmem:[#allocation1 + $0x30] sm:$0xff pattern:$0x73625140]
    %v335 = vld.sshfl [vmem:[#allocation1 + $0x38] sm:$0xff pattern:$0x73625140]
    %336 = vst [vmem:[#allocation1] ss:$4 sm:$0xff] %v43
    %337 = vst [vmem:[%s276] ss:$4 sm:$0xff] %v44
    %v338 = vld.sshfl [vmem:[#allocation1] sm:$0xff pattern:$0x73625140]
    %v339 = vld.sshfl [vmem:[#allocation1 + $0x8] sm:$0xff pattern:$0x73625140]
    %v340 = vld.sshfl [vmem:[#allocation1 + $0x10] sm:$0xff pattern:$0x73625140]
    %v341 = vld.sshfl [vmem:[#allocation1 + $0x18] sm:$0xff pattern:$0x73625140]
    %v342 = vld.sshfl [vmem:[#allocation1 + $0x20] sm:$0xff pattern:$0x73625140]
    %v343 = vld.sshfl [vmem:[#allocation1 + $0x28] sm:$0xff pattern:$0x73625140]
    %v344 = vld.sshfl [vmem:[#allocation1 + $0x30] sm:$0xff pattern:$0x73625140]
    %v345 = vld.sshfl [vmem:[#allocation1 + $0x38] sm:$0xff pattern:$0x73625140]
    %346 = vst [vmem:[#allocation1] ss:$4 sm:$0xff] %v45
    %347 = vst [vmem:[%s276] ss:$4 sm:$0xff] %v46
    %v348 = vld.sshfl [vmem:[#allocation1] sm:$0xff pattern:$0x73625140]
    %v349 = vld.sshfl [vmem:[#allocation1 + $0x8] sm:$0xff pattern:$0x73625140]
    %v350 = vld.sshfl [vmem:[#allocation1 + $0x10] sm:$0xff pattern:$0x73625140]
    %v351 = vld.sshfl [vmem:[#allocation1 + $0x18] sm:$0xff pattern:$0x73625140]
    %v352 = vld.sshfl [vmem:[#allocation1 + $0x20] sm:$0xff pattern:$0x73625140]
    %v353 = vld.sshfl [vmem:[#allocation1 + $0x28] sm:$0xff pattern:$0x73625140]
    %v354 = vld.sshfl [vmem:[#allocation1 + $0x30] sm:$0xff pattern:$0x73625140]
    %v355 = vld.sshfl [vmem:[#allocation1 + $0x38] sm:$0xff pattern:$0x73625140]
    %356 = vst [vmem:[#allocation1] ss:$4 sm:$0xff] %v47
    %357 = vst [vmem:[%s276] ss:$4 sm:$0xff] %v48
    %v358 = vld.sshfl [vmem:[#allocation1] sm:$0xff pattern:$0x73625140]
    %v359 = vld.sshfl [vmem:[#allocation1 + $0x8] sm:$0xff pattern:$0x73625140]
    %v360 = vld.sshfl [vmem:[#allocation1 + $0x10] sm:$0xff pattern:$0x73625140]
    %v361 = vld.sshfl [vmem:[#allocation1 + $0x18] sm:$0xff pattern:$0x73625140]
    %v362 = vld.sshfl [vmem:[#allocation1 + $0x20] sm:$0xff pattern:$0x73625140]
    %v363 = vld.sshfl [vmem:[#allocation1 + $0x28] sm:$0xff pattern:$0x73625140]
    %v364 = vld.sshfl [vmem:[#allocation1 + $0x30] sm:$0xff pattern:$0x73625140]
    %v365 = vld.sshfl [vmem:[#allocation1 + $0x38] sm:$0xff pattern:$0x73625140]
    %366 = vst [vmem:[#allocation1] ss:$4 sm:$0xff] %v49
    %367 = vst [vmem:[%s276] ss:$4 sm:$0xff] %v50
    %v368 = vld.sshfl [vmem:[#allocation1] sm:$0xff pattern:$0x73625140]
    %v369 = vld.sshfl [vmem:[#allocation1 + $0x8] sm:$0xff pattern:$0x73625140]
    %v370 = vld.sshfl [vmem:[#allocation1 + $0x10] sm:$0xff pattern:$0x73625140]
    %v371 = vld.sshfl [vmem:[#allocation1 + $0x18] sm:$0xff pattern:$0x73625140]
    %v372 = vld.sshfl [vmem:[#allocation1 + $0x20] sm:$0xff pattern:$0x73625140]
    %v373 = vld.sshfl [vmem:[#allocation1 + $0x28] sm:$0xff pattern:$0x73625140]
    %v374 = vld.sshfl [vmem:[#allocation1 + $0x30] sm:$0xff pattern:$0x73625140]
    %v375 = vld.sshfl [vmem:[#allocation1 + $0x38] sm:$0xff pattern:$0x73625140]
    %376 = vst [vmem:[#allocation1] ss:$4 sm:$0xff] %v51
    %377 = vst [vmem:[%s276] ss:$4 sm:$0xff] %v52
    %v378 = vld.sshfl [vmem:[#allocation1] sm:$0xff pattern:$0x73625140]
    %v379 = vld.sshfl [vmem:[#allocation1 + $0x8] sm:$0xff pattern:$0x73625140]
    %v380 = vld.sshfl [vmem:[#allocation1 + $0x10] sm:$0xff pattern:$0x73625140]
    %v381 = vld.sshfl [vmem:[#allocation1 + $0x18] sm:$0xff pattern:$0x73625140]
    %v382 = vld.sshfl [vmem:[#allocation1 + $0x20] sm:$0xff pattern:$0x73625140]
    %v383 = vld.sshfl [vmem:[#allocation1 + $0x28] sm:$0xff pattern:$0x73625140]
    %v384 = vld.sshfl [vmem:[#allocation1 + $0x30] sm:$0xff pattern:$0x73625140]
    %v385 = vld.sshfl [vmem:[#allocation1 + $0x38] sm:$0xff pattern:$0x73625140]
    %386 = vst [vmem:[#allocation1] ss:$4 sm:$0xff] %v53
    %387 = vst [vmem:[%s276] ss:$4 sm:$0xff] %v54
    %v388 = vld.sshfl [vmem:[#allocation1] sm:$0xff pattern:$0x73625140]
    %v389 = vld.sshfl [vmem:[#allocation1 + $0x8] sm:$0xff pattern:$0x73625140]
    %v390 = vld.sshfl [vmem:[#allocation1 + $0x10] sm:$0xff pattern:$0x73625140]
    %v391 = vld.sshfl [vmem:[#allocation1 + $0x18] sm:$0xff pattern:$0x73625140]
    %v392 = vld.sshfl [vmem:[#allocation1 + $0x20] sm:$0xff pattern:$0x73625140]
    %v393 = vld.sshfl [vmem:[#allocation1 + $0x28] sm:$0xff pattern:$0x73625140]
    %v394 = vld.sshfl [vmem:[#allocation1 + $0x30] sm:$0xff pattern:$0x73625140]
    %v395 = vld.sshfl [vmem:[#allocation1 + $0x38] sm:$0xff pattern:$0x73625140]
    %492 = vmatpush.xpose.msra.mxu0 0.0
    %493 = vmatpush.xpose.msra.mxu0 0.0
    %494 = vmatpush.xpose.msra.mxu0 0.0
    %495 = vmatpush.xpose.msra.mxu0 0.0
    %496 = vmatpush.xpose.msra.mxu0 0.0
    %497 = vmatpush.xpose.msra.mxu0 0.0
    %498 = vmatpush.xpose.msra.mxu0 0.0
    %499 = vmatpush.xpose.msra.mxu0 0.0
    %500 = vmatpush.xpose.msra.mxu0 0.0
    %501 = vmatpush.xpose.msra.mxu0 0.0
    %502 = vmatpush.xpose.msra.mxu0 0.0
    %503 = vmatpush.xpose.msra.mxu0 0.0
    %504 = vmatpush.xpose.msra.mxu0 0.0
    %505 = vmatpush.xpose.msra.mxu0 0.0
    %506 = vmatpush.xpose.msra.mxu0 %v151
    %507 = vmatpush.xpose.msra.mxu0 %v55
    %508 = vmatmul.f32.gmra.mxu0 %v278
    %v509 = vpop.f32.mrf.mxu0
    %v510 = vadd.f32 %v249, %v509
    %511 = vdwg.mxu0
    %512 = vmatpush.xpose.msra.mxu0 0.0
    %513 = vmatpush.xpose.msra.mxu0 0.0
    %514 = vmatpush.xpose.msra.mxu0 0.0
    %515 = vmatpush.xpose.msra.mxu0 0.0
    %516 = vmatpush.xpose.msra.mxu0 0.0
    %517 = vmatpush.xpose.msra.mxu0 0.0
    %518 = vmatpush.xpose.msra.mxu0 0.0
    %519 = vmatpush.xpose.msra.mxu0 0.0
    %520 = vmatpush.xpose.msra.mxu0 0.0
    %521 = vmatpush.xpose.msra.mxu0 0.0
    %522 = vmatpush.xpose.msra.mxu0 0.0
    %523 = vmatpush.xpose.msra.mxu0 0.0
    %524 = vmatpush.xpose.msra.mxu0 0.0
    %525 = vmatpush.xpose.msra.mxu0 0.0
    %526 = vmatpush.xpose.msra.mxu0 %v152
    %527 = vmatpush.xpose.msra.mxu0 %v56
    %528 = vmatmul.f32.gmra.mxu0 %v279
    %v529 = vpop.f32.mrf.mxu0
    %v530 = vadd.f32 %v510, %v529
    %531 = vdwg.mxu0
    %532 = vmatpush.xpose.msra.mxu0 0.0
    %533 = vmatpush.xpose.msra.mxu0 0.0
    %534 = vmatpush.xpose.msra.mxu0 0.0
    %535 = vmatpush.xpose.msra.mxu0 0.0
    %536 = vmatpush.xpose.msra.mxu0 0.0
    %537 = vmatpush.xpose.msra.mxu0 0.0
    %538 = vmatpush.xpose.msra.mxu0 0.0
    %539 = vmatpush.xpose.msra.mxu0 0.0
    %540 = vmatpush.xpose.msra.mxu0 0.0
    %541 = vmatpush.xpose.msra.mxu0 0.0
    %542 = vmatpush.xpose.msra.mxu0 0.0
    %543 = vmatpush.xpose.msra.mxu0 0.0
    %544 = vmatpush.xpose.msra.mxu0 0.0
    %545 = vmatpush.xpose.msra.mxu0 0.0
    %546 = vmatpush.xpose.msra.mxu0 %v153
    %547 = vmatpush.xpose.msra.mxu0 %v57
    %548 = vmatmul.f32.gmra.mxu0 %v280
    %v549 = vpop.f32.mrf.mxu0
    %v550 = vadd.f32 %v530, %v549
    %551 = vdwg.mxu0
    %552 = vmatpush.xpose.msra.mxu0 0.0
    %553 = vmatpush.xpose.msra.mxu0 0.0
    %554 = vmatpush.xpose.msra.mxu0 0.0
    %555 = vmatpush.xpose.msra.mxu0 0.0
    %556 = vmatpush.xpose.msra.mxu0 0.0
    %557 = vmatpush.xpose.msra.mxu0 0.0
    %558 = vmatpush.xpose.msra.mxu0 0.0
    %559 = vmatpush.xpose.msra.mxu0 0.0
    %560 = vmatpush.xpose.msra.mxu0 0.0
    %561 = vmatpush.xpose.msra.mxu0 0.0
    %562 = vmatpush.xpose.msra.mxu0 0.0
    %563 = vmatpush.xpose.msra.mxu0 0.0
    %564 = vmatpush.xpose.msra.mxu0 0.0
    %565 = vmatpush.xpose.msra.mxu0 0.0
    %566 = vmatpush.xpose.msra.mxu0 %v154
    %567 = vmatpush.xpose.msra.mxu0 %v58
    %568 = vmatmul.f32.gmra.mxu0 %v281
    %v569 = vpop.f32.mrf.mxu0
    %v570 = vadd.f32 %v550, %v569
    %571 = vdwg.mxu0
    %572 = vmatpush.xpose.msra.mxu0 0.0
    %573 = vmatpush.xpose.msra.mxu0 0.0
    %574 = vmatpush.xpose.msra.mxu0 0.0
    %575 = vmatpush.xpose.msra.mxu0 0.0
    %576 = vmatpush.xpose.msra.mxu0 0.0
    %577 = vmatpush.xpose.msra.mxu0 0.0
    %578 = vmatpush.xpose.msra.mxu0 0.0
    %579 = vmatpush.xpose.msra.mxu0 0.0
    %580 = vmatpush.xpose.msra.mxu0 0.0
    %581 = vmatpush.xpose.msra.mxu0 0.0
    %582 = vmatpush.xpose.msra.mxu0 0.0
    %583 = vmatpush.xpose.msra.mxu0 0.0
    %584 = vmatpush.xpose.msra.mxu0 0.0
    %585 = vmatpush.xpose.msra.mxu0 0.0
    %586 = vmatpush.xpose.msra.mxu0 %v155
    %587 = vmatpush.xpose.msra.mxu0 %v59
    %588 = vmatmul.f32.gmra.mxu0 %v282
    %v589 = vpop.f32.mrf.mxu0
    %v590 = vadd.f32 %v570, %v589
    %591 = vdwg.mxu0
    %592 = vmatpush.xpose.msra.mxu0 0.0
    %593 = vmatpush.xpose.msra.mxu0 0.0
    %594 = vmatpush.xpose.msra.mxu0 0.0
    %595 = vmatpush.xpose.msra.mxu0 0.0
    %596 = vmatpush.xpose.msra.mxu0 0.0
    %597 = vmatpush.xpose.msra.mxu0 0.0
    %598 = vmatpush.xpose.msra.mxu0 0.0
    %599 = vmatpush.xpose.msra.mxu0 0.0
    %600 = vmatpush.xpose.msra.mxu0 0.0
    %601 = vmatpush.xpose.msra.mxu0 0.0
    %602 = vmatpush.xpose.msra.mxu0 0.0
    %603 = vmatpush.xpose.msra.mxu0 0.0
    %604 = vmatpush.xpose.msra.mxu0 0.0
    %605 = vmatpush.xpose.msra.mxu0 0.0
    %606 = vmatpush.xpose.msra.mxu0 %v156
    %607 = vmatpush.xpose.msra.mxu0 %v60
    %608 = vmatmul.f32.gmra.mxu0 %v283
    %v609 = vpop.f32.mrf.mxu0
    %v610 = vadd.f32 %v590, %v609
    %611 = vdwg.mxu0
    %612 = vmatpush.xpose.msra.mxu0 0.0
    %613 = vmatpush.xpose.msra.mxu0 0.0
    %614 = vmatpush.xpose.msra.mxu0 0.0
    %615 = vmatpush.xpose.msra.mxu0 0.0
    %616 = vmatpush.xpose.msra.mxu0 0.0
    %617 = vmatpush.xpose.msra.mxu0 0.0
    %618 = vmatpush.xpose.msra.mxu0 0.0
    %619 = vmatpush.xpose.msra.mxu0 0.0
    %620 = vmatpush.xpose.msra.mxu0 0.0
    %621 = vmatpush.xpose.msra.mxu0 0.0
    %622 = vmatpush.xpose.msra.mxu0 0.0
    %623 = vmatpush.xpose.msra.mxu0 0.0
    %624 = vmatpush.xpose.msra.mxu0 0.0
    %625 = vmatpush.xpose.msra.mxu0 0.0
    %626 = vmatpush.xpose.msra.mxu0 %v157
    %627 = vmatpush.xpose.msra.mxu0 %v61
    %628 = vmatmul.f32.gmra.mxu0 %v284
    %v629 = vpop.f32.mrf.mxu0
    %v630 = vadd.f32 %v610, %v629
    %631 = vdwg.mxu0
    %632 = vmatpush.xpose.msra.mxu0 0.0
    %633 = vmatpush.xpose.msra.mxu0 0.0
    %634 = vmatpush.xpose.msra.mxu0 0.0
    %635 = vmatpush.xpose.msra.mxu0 0.0
    %636 = vmatpush.xpose.msra.mxu0 0.0
    %637 = vmatpush.xpose.msra.mxu0 0.0
    %638 = vmatpush.xpose.msra.mxu0 0.0
    %639 = vmatpush.xpose.msra.mxu0 0.0
    %640 = vmatpush.xpose.msra.mxu0 0.0
    %641 = vmatpush.xpose.msra.mxu0 0.0
    %642 = vmatpush.xpose.msra.mxu0 0.0
    %643 = vmatpush.xpose.msra.mxu0 0.0
    %644 = vmatpush.xpose.msra.mxu0 0.0
    %645 = vmatpush.xpose.msra.mxu0 0.0
    %646 = vmatpush.xpose.msra.mxu0 %v158
    %647 = vmatpush.xpose.msra.mxu0 %v62
    %648 = vmatmul.f32.gmra.mxu0 %v285
    %v649 = vpop.f32.mrf.mxu0
    %v650 = vadd.f32 %v630, %v649
    %651 = vdwg.mxu0
    %652 = vmatpush.xpose.msra.mxu0 0.0
    %653 = vmatpush.xpose.msra.mxu0 0.0
    %654 = vmatpush.xpose.msra.mxu0 0.0
    %655 = vmatpush.xpose.msra.mxu0 0.0
    %656 = vmatpush.xpose.msra.mxu0 0.0
    %657 = vmatpush.xpose.msra.mxu0 0.0
    %658 = vmatpush.xpose.msra.mxu0 0.0
    %659 = vmatpush.xpose.msra.mxu0 0.0
    %660 = vmatpush.xpose.msra.mxu0 0.0
    %661 = vmatpush.xpose.msra.mxu0 0.0
    %662 = vmatpush.xpose.msra.mxu0 0.0
    %663 = vmatpush.xpose.msra.mxu0 0.0
    %664 = vmatpush.xpose.msra.mxu0 0.0
    %665 = vmatpush.xpose.msra.mxu0 0.0
    %666 = vmatpush.xpose.msra.mxu0 %v159
    %667 = vmatpush.xpose.msra.mxu0 %v63
    %668 = vmatmul.f32.gmra.mxu0 %v288
    %v669 = vpop.f32.mrf.mxu0
    %v670 = vadd.f32 %v650, %v669
    %671 = vdwg.mxu0
    %672 = vmatpush.xpose.msra.mxu0 0.0
    %673 = vmatpush.xpose.msra.mxu0 0.0
    %674 = vmatpush.xpose.msra.mxu0 0.0
    %675 = vmatpush.xpose.msra.mxu0 0.0
    %676 = vmatpush.xpose.msra.mxu0 0.0
    %677 = vmatpush.xpose.msra.mxu0 0.0
    %678 = vmatpush.xpose.msra.mxu0 0.0
    %679 = vmatpush.xpose.msra.mxu0 0.0
    %680 = vmatpush.xpose.msra.mxu0 0.0
    %681 = vmatpush.xpose.msra.mxu0 0.0
    %682 = vmatpush.xpose.msra.mxu0 0.0
    %683 = vmatpush.xpose.msra.mxu0 0.0
    %684 = vmatpush.xpose.msra.mxu0 0.0
    %685 = vmatpush.xpose.msra.mxu0 0.0
    %686 = vmatpush.xpose.msra.mxu0 %v160
    %687 = vmatpush.xpose.msra.mxu0 %v64
    %688 = vmatmul.f32.gmra.mxu0 %v289
    %v689 = vpop.f32.mrf.mxu0
    %v690 = vadd.f32 %v670, %v689
    %691 = vdwg.mxu0
    %692 = vmatpush.xpose.msra.mxu0 0.0
    %693 = vmatpush.xpose.msra.mxu0 0.0
    %694 = vmatpush.xpose.msra.mxu0 0.0
    %695 = vmatpush.xpose.msra.mxu0 0.0
    %696 = vmatpush.xpose.msra.mxu0 0.0
    %697 = vmatpush.xpose.msra.mxu0 0.0
    %698 = vmatpush.xpose.msra.mxu0 0.0
    %699 = vmatpush.xpose.msra.mxu0 0.0
    %700 = vmatpush.xpose.msra.mxu0 0.0
    %701 = vmatpush.xpose.msra.mxu0 0.0
    %702 = vmatpush.xpose.msra.mxu0 0.0
    %703 = vmatpush.xpose.msra.mxu0 0.0
    %704 = vmatpush.xpose.msra.mxu0 0.0
    %705 = vmatpush.xpose.msra.mxu0 0.0
    %706 = vmatpush.xpose.msra.mxu0 %v161
    %707 = vmatpush.xpose.msra.mxu0 %v65
    %708 = vmatmul.f32.gmra.mxu0 %v290
    %v709 = vpop.f32.mrf.mxu0
    %v710 = vadd.f32 %v690, %v709
    %711 = vdwg.mxu0
    %712 = vmatpush.xpose.msra.mxu0 0.0
    %713 = vmatpush.xpose.msra.mxu0 0.0
    %714 = vmatpush.xpose.msra.mxu0 0.0
    %715 = vmatpush.xpose.msra.mxu0 0.0
    %716 = vmatpush.xpose.msra.mxu0 0.0
    %717 = vmatpush.xpose.msra.mxu0 0.0
    %718 = vmatpush.xpose.msra.mxu0 0.0
    %719 = vmatpush.xpose.msra.mxu0 0.0
    %720 = vmatpush.xpose.msra.mxu0 0.0
    %721 = vmatpush.xpose.msra.mxu0 0.0
    %722 = vmatpush.xpose.msra.mxu0 0.0
    %723 = vmatpush.xpose.msra.mxu0 0.0
    %724 = vmatpush.xpose.msra.mxu0 0.0
    %725 = vmatpush.xpose.msra.mxu0 0.0
    %726 = vmatpush.xpose.msra.mxu0 %v162
    %727 = vmatpush.xpose.msra.mxu0 %v66
    %728 = vmatmul.f32.gmra.mxu0 %v291
    %v729 = vpop.f32.mrf.mxu0
    %v730 = vadd.f32 %v710, %v729
    %731 = vdwg.mxu0
    %732 = vmatpush.xpose.msra.mxu0 0.0
    %733 = vmatpush.xpose.msra.mxu0 0.0
    %734 = vmatpush.xpose.msra.mxu0 0.0
    %735 = vmatpush.xpose.msra.mxu0 0.0
    %736 = vmatpush.xpose.msra.mxu0 0.0
    %737 = vmatpush.xpose.msra.mxu0 0.0
    %738 = vmatpush.xpose.msra.mxu0 0.0
    %739 = vmatpush.xpose.msra.mxu0 0.0
    %740 = vmatpush.xpose.msra.mxu0 0.0
    %741 = vmatpush.xpose.msra.mxu0 0.0
    %742 = vmatpush.xpose.msra.mxu0 0.0
    %743 = vmatpush.xpose.msra.mxu0 0.0
    %744 = vmatpush.xpose.msra.mxu0 0.0
    %745 = vmatpush.xpose.msra.mxu0 0.0
    %746 = vmatpush.xpose.msra.mxu0 %v163
    %747 = vmatpush.xpose.msra.mxu0 %v67
    %748 = vmatmul.f32.gmra.mxu0 %v292
    %v749 = vpop.f32.mrf.mxu0
    %v750 = vadd.f32 %v730, %v749
    %751 = vdwg.mxu0
    %752 = vmatpush.xpose.msra.mxu0 0.0
    %753 = vmatpush.xpose.msra.mxu0 0.0
    %754 = vmatpush.xpose.msra.mxu0 0.0
    %755 = vmatpush.xpose.msra.mxu0 0.0
    %756 = vmatpush.xpose.msra.mxu0 0.0
    %757 = vmatpush.xpose.msra.mxu0 0.0
    %758 = vmatpush.xpose.msra.mxu0 0.0
    %759 = vmatpush.xpose.msra.mxu0 0.0
    %760 = vmatpush.xpose.msra.mxu0 0.0
    %761 = vmatpush.xpose.msra.mxu0 0.0
    %762 = vmatpush.xpose.msra.mxu0 0.0
    %763 = vmatpush.xpose.msra.mxu0 0.0
    %764 = vmatpush.xpose.msra.mxu0 0.0
    %765 = vmatpush.xpose.msra.mxu0 0.0
    %766 = vmatpush.xpose.msra.mxu0 %v164
    %767 = vmatpush.xpose.msra.mxu0 %v68
    %768 = vmatmul.f32.gmra.mxu0 %v293
    %v769 = vpop.f32.mrf.mxu0
    %v770 = vadd.f32 %v750, %v769
    %771 = vdwg.mxu0
    %772 = vmatpush.xpose.msra.mxu0 0.0
    %773 = vmatpush.xpose.msra.mxu0 0.0
    %774 = vmatpush.xpose.msra.mxu0 0.0
    %775 = vmatpush.xpose.msra.mxu0 0.0
    %776 = vmatpush.xpose.msra.mxu0 0.0
    %777 = vmatpush.xpose.msra.mxu0 0.0
    %778 = vmatpush.xpose.msra.mxu0 0.0
    %779 = vmatpush.xpose.msra.mxu0 0.0
    %780 = vmatpush.xpose.msra.mxu0 0.0
    %781 = vmatpush.xpose.msra.mxu0 0.0
    %782 = vmatpush.xpose.msra.mxu0 0.0
    %783 = vmatpush.xpose.msra.mxu0 0.0
    %784 = vmatpush.xpose.msra.mxu0 0.0
    %785 = vmatpush.xpose.msra.mxu0 0.0
    %786 = vmatpush.xpose.msra.mxu0 %v165
    %787 = vmatpush.xpose.msra.mxu0 %v69
    %788 = vmatmul.f32.gmra.mxu0 %v294
    %v789 = vpop.f32.mrf.mxu0
    %v790 = vadd.f32 %v770, %v789
    %791 = vdwg.mxu0
    %792 = vmatpush.xpose.msra.mxu0 0.0
    %793 = vmatpush.xpose.msra.mxu0 0.0
    %794 = vmatpush.xpose.msra.mxu0 0.0
    %795 = vmatpush.xpose.msra.mxu0 0.0
    %796 = vmatpush.xpose.msra.mxu0 0.0
    %797 = vmatpush.xpose.msra.mxu0 0.0
    %798 = vmatpush.xpose.msra.mxu0 0.0
    %799 = vmatpush.xpose.msra.mxu0 0.0
    %800 = vmatpush.xpose.msra.mxu0 0.0
    %801 = vmatpush.xpose.msra.mxu0 0.0
    %802 = vmatpush.xpose.msra.mxu0 0.0
    %803 = vmatpush.xpose.msra.mxu0 0.0
    %804 = vmatpush.xpose.msra.mxu0 0.0
    %805 = vmatpush.xpose.msra.mxu0 0.0
    %806 = vmatpush.xpose.msra.mxu0 %v166
    %807 = vmatpush.xpose.msra.mxu0 %v70
    %808 = vmatmul.f32.gmra.mxu0 %v295
    %v809 = vpop.f32.mrf.mxu0
    %v810 = vadd.f32 %v790, %v809
    %811 = vdwg.mxu0
    %812 = vmatpush.xpose.msra.mxu0 0.0
    %813 = vmatpush.xpose.msra.mxu0 0.0
    %814 = vmatpush.xpose.msra.mxu0 0.0
    %815 = vmatpush.xpose.msra.mxu0 0.0
    %816 = vmatpush.xpose.msra.mxu0 0.0
    %817 = vmatpush.xpose.msra.mxu0 0.0
    %818 = vmatpush.xpose.msra.mxu0 0.0
    %819 = vmatpush.xpose.msra.mxu0 0.0
    %820 = vmatpush.xpose.msra.mxu0 0.0
    %821 = vmatpush.xpose.msra.mxu0 0.0
    %822 = vmatpush.xpose.msra.mxu0 0.0
    %823 = vmatpush.xpose.msra.mxu0 0.0
    %824 = vmatpush.xpose.msra.mxu0 0.0
    %825 = vmatpush.xpose.msra.mxu0 0.0
    %826 = vmatpush.xpose.msra.mxu0 %v167
    %827 = vmatpush.xpose.msra.mxu0 %v71
    %828 = vmatmul.f32.gmra.mxu0 %v298
    %v829 = vpop.f32.mrf.mxu0
    %v830 = vadd.f32 %v810, %v829
    %831 = vdwg.mxu0
    %832 = vmatpush.xpose.msra.mxu0 0.0
    %833 = vmatpush.xpose.msra.mxu0 0.0
    %834 = vmatpush.xpose.msra.mxu0 0.0
    %835 = vmatpush.xpose.msra.mxu0 0.0
    %836 = vmatpush.xpose.msra.mxu0 0.0
    %837 = vmatpush.xpose.msra.mxu0 0.0
    %838 = vmatpush.xpose.msra.mxu0 0.0
    %839 = vmatpush.xpose.msra.mxu0 0.0
    %840 = vmatpush.xpose.msra.mxu0 0.0
    %841 = vmatpush.xpose.msra.mxu0 0.0
    %842 = vmatpush.xpose.msra.mxu0 0.0
    %843 = vmatpush.xpose.msra.mxu0 0.0
    %844 = vmatpush.xpose.msra.mxu0 0.0
    %845 = vmatpush.xpose.msra.mxu0 0.0
    %846 = vmatpush.xpose.msra.mxu0 %v168
    %847 = vmatpush.xpose.msra.mxu0 %v72
    %848 = vmatmul.f32.gmra.mxu0 %v299
    %v849 = vpop.f32.mrf.mxu0
    %v850 = vadd.f32 %v830, %v849
    %851 = vdwg.mxu0
    %852 = vmatpush.xpose.msra.mxu0 0.0
    %853 = vmatpush.xpose.msra.mxu0 0.0
    %854 = vmatpush.xpose.msra.mxu0 0.0
    %855 = vmatpush.xpose.msra.mxu0 0.0
    %856 = vmatpush.xpose.msra.mxu0 0.0
    %857 = vmatpush.xpose.msra.mxu0 0.0
    %858 = vmatpush.xpose.msra.mxu0 0.0
    %859 = vmatpush.xpose.msra.mxu0 0.0
    %860 = vmatpush.xpose.msra.mxu0 0.0
    %861 = vmatpush.xpose.msra.mxu0 0.0
    %862 = vmatpush.xpose.msra.mxu0 0.0
    %863 = vmatpush.xpose.msra.mxu0 0.0
    %864 = vmatpush.xpose.msra.mxu0 0.0
    %865 = vmatpush.xpose.msra.mxu0 0.0
    %866 = vmatpush.xpose.msra.mxu0 %v169
    %867 = vmatpush.xpose.msra.mxu0 %v73
    %868 = vmatmul.f32.gmra.mxu0 %v300
    %v869 = vpop.f32.mrf.mxu0
    %v870 = vadd.f32 %v850, %v869
    %871 = vdwg.mxu0
    %872 = vmatpush.xpose.msra.mxu0 0.0
    %873 = vmatpush.xpose.msra.mxu0 0.0
    %874 = vmatpush.xpose.msra.mxu0 0.0
    %875 = vmatpush.xpose.msra.mxu0 0.0
    %876 = vmatpush.xpose.msra.mxu0 0.0
    %877 = vmatpush.xpose.msra.mxu0 0.0
    %878 = vmatpush.xpose.msra.mxu0 0.0
    %879 = vmatpush.xpose.msra.mxu0 0.0
    %880 = vmatpush.xpose.msra.mxu0 0.0
    %881 = vmatpush.xpose.msra.mxu0 0.0
    %882 = vmatpush.xpose.msra.mxu0 0.0
    %883 = vmatpush.xpose.msra.mxu0 0.0
    %884 = vmatpush.xpose.msra.mxu0 0.0
    %885 = vmatpush.xpose.msra.mxu0 0.0
    %886 = vmatpush.xpose.msra.mxu0 %v170
    %887 = vmatpush.xpose.msra.mxu0 %v74
    %888 = vmatmul.f32.gmra.mxu0 %v301
    %v889 = vpop.f32.mrf.mxu0
    %v890 = vadd.f32 %v870, %v889
    %891 = vdwg.mxu0
    %892 = vmatpush.xpose.msra.mxu0 0.0
    %893 = vmatpush.xpose.msra.mxu0 0.0
    %894 = vmatpush.xpose.msra.mxu0 0.0
    %895 = vmatpush.xpose.msra.mxu0 0.0
    %896 = vmatpush.xpose.msra.mxu0 0.0
    %897 = vmatpush.xpose.msra.mxu0 0.0
    %898 = vmatpush.xpose.msra.mxu0 0.0
    %899 = vmatpush.xpose.msra.mxu0 0.0
    %900 = vmatpush.xpose.msra.mxu0 0.0
    %901 = vmatpush.xpose.msra.mxu0 0.0
    %902 = vmatpush.xpose.msra.mxu0 0.0
    %903 = vmatpush.xpose.msra.mxu0 0.0
    %904 = vmatpush.xpose.msra.mxu0 0.0
    %905 = vmatpush.xpose.msra.mxu0 0.0
    %906 = vmatpush.xpose.msra.mxu0 %v171
    %907 = vmatpush.xpose.msra.mxu0 %v75
    %908 = vmatmul.f32.gmra.mxu0 %v302
    %v909 = vpop.f32.mrf.mxu0
    %v910 = vadd.f32 %v890, %v909
    %911 = vdwg.mxu0
    %912 = vmatpush.xpose.msra.mxu0 0.0
    %913 = vmatpush.xpose.msra.mxu0 0.0
    %914 = vmatpush.xpose.msra.mxu0 0.0
    %915 = vmatpush.xpose.msra.mxu0 0.0
    %916 = vmatpush.xpose.msra.mxu0 0.0
    %917 = vmatpush.xpose.msra.mxu0 0.0
    %918 = vmatpush.xpose.msra.mxu0 0.0
    %919 = vmatpush.xpose.msra.mxu0 0.0
    %920 = vmatpush.xpose.msra.mxu0 0.0
    %921 = vmatpush.xpose.msra.mxu0 0.0
    %922 = vmatpush.xpose.msra.mxu0 0.0
    %923 = vmatpush.xpose.msra.mxu0 0.0
    %924 = vmatpush.xpose.msra.mxu0 0.0
    %925 = vmatpush.xpose.msra.mxu0 0.0
    %926 = vmatpush.xpose.msra.mxu0 %v172
    %927 = vmatpush.xpose.msra.mxu0 %v76
    %928 = vmatmul.f32.gmra.mxu0 %v303
    %v929 = vpop.f32.mrf.mxu0
    %v930 = vadd.f32 %v910, %v929
    %931 = vdwg.mxu0
    %932 = vmatpush.xpose.msra.mxu0 0.0
    %933 = vmatpush.xpose.msra.mxu0 0.0
    %934 = vmatpush.xpose.msra.mxu0 0.0
    %935 = vmatpush.xpose.msra.mxu0 0.0
    %936 = vmatpush.xpose.msra.mxu0 0.0
    %937 = vmatpush.xpose.msra.mxu0 0.0
    %938 = vmatpush.xpose.msra.mxu0 0.0
    %939 = vmatpush.xpose.msra.mxu0 0.0
    %940 = vmatpush.xpose.msra.mxu0 0.0
    %941 = vmatpush.xpose.msra.mxu0 0.0
    %942 = vmatpush.xpose.msra.mxu0 0.0
    %943 = vmatpush.xpose.msra.mxu0 0.0
    %944 = vmatpush.xpose.msra.mxu0 0.0
    %945 = vmatpush.xpose.msra.mxu0 0.0
    %946 = vmatpush.xpose.msra.mxu0 %v173
    %947 = vmatpush.xpose.msra.mxu0 %v77
    %948 = vmatmul.f32.gmra.mxu0 %v304
    %v949 = vpop.f32.mrf.mxu0
    %v950 = vadd.f32 %v930, %v949
    %951 = vdwg.mxu0
    %952 = vmatpush.xpose.msra.mxu0 0.0
    %953 = vmatpush.xpose.msra.mxu0 0.0
    %954 = vmatpush.xpose.msra.mxu0 0.0
    %955 = vmatpush.xpose.msra.mxu0 0.0
    %956 = vmatpush.xpose.msra.mxu0 0.0
    %957 = vmatpush.xpose.msra.mxu0 0.0
    %958 = vmatpush.xpose.msra.mxu0 0.0
    %959 = vmatpush.xpose.msra.mxu0 0.0
    %960 = vmatpush.xpose.msra.mxu0 0.0
    %961 = vmatpush.xpose.msra.mxu0 0.0
    %962 = vmatpush.xpose.msra.mxu0 0.0
    %963 = vmatpush.xpose.msra.mxu0 0.0
    %964 = vmatpush.xpose.msra.mxu0 0.0
    %965 = vmatpush.xpose.msra.mxu0 0.0
    %966 = vmatpush.xpose.msra.mxu0 %v174
    %967 = vmatpush.xpose.msra.mxu0 %v78
    %968 = vmatmul.f32.gmra.mxu0 %v305
    %v969 = vpop.f32.mrf.mxu0
    %v970 = vadd.f32 %v950, %v969
    %971 = vdwg.mxu0
    %972 = vmatpush.xpose.msra.mxu0 0.0
    %973 = vmatpush.xpose.msra.mxu0 0.0
    %974 = vmatpush.xpose.msra.mxu0 0.0
    %975 = vmatpush.xpose.msra.mxu0 0.0
    %976 = vmatpush.xpose.msra.mxu0 0.0
    %977 = vmatpush.xpose.msra.mxu0 0.0
    %978 = vmatpush.xpose.msra.mxu0 0.0
    %979 = vmatpush.xpose.msra.mxu0 0.0
    %980 = vmatpush.xpose.msra.mxu0 0.0
    %981 = vmatpush.xpose.msra.mxu0 0.0
    %982 = vmatpush.xpose.msra.mxu0 0.0
    %983 = vmatpush.xpose.msra.mxu0 0.0
    %984 = vmatpush.xpose.msra.mxu0 0.0
    %985 = vmatpush.xpose.msra.mxu0 0.0
    %986 = vmatpush.xpose.msra.mxu0 %v175
    %987 = vmatpush.xpose.msra.mxu0 %v79
    %988 = vmatmul.f32.gmra.mxu0 %v308
    %v989 = vpop.f32.mrf.mxu0
    %v990 = vadd.f32 %v970, %v989
    %991 = vdwg.mxu0
    %992 = vmatpush.xpose.msra.mxu0 0.0
    %993 = vmatpush.xpose.msra.mxu0 0.0
    %994 = vmatpush.xpose.msra.mxu0 0.0
    %995 = vmatpush.xpose.msra.mxu0 0.0
    %996 = vmatpush.xpose.msra.mxu0 0.0
    %997 = vmatpush.xpose.msra.mxu0 0.0
    %998 = vmatpush.xpose.msra.mxu0 0.0
    %999 = vmatpush.xpose.msra.mxu0 0.0
    %1000 = vmatpush.xpose.msra.mxu0 0.0
    %1001 = vmatpush.xpose.msra.mxu0 0.0
    %1002 = vmatpush.xpose.msra.mxu0 0.0
    %1003 = vmatpush.xpose.msra.mxu0 0.0
    %1004 = vmatpush.xpose.msra.mxu0 0.0
    %1005 = vmatpush.xpose.msra.mxu0 0.0
    %1006 = vmatpush.xpose.msra.mxu0 %v176
    %1007 = vmatpush.xpose.msra.mxu0 %v80
    %1008 = vmatmul.f32.gmra.mxu0 %v309
    %v1009 = vpop.f32.mrf.mxu0
    %v1010 = vadd.f32 %v990, %v1009
    %1011 = vdwg.mxu0
    %1012 = vmatpush.xpose.msra.mxu0 0.0
    %1013 = vmatpush.xpose.msra.mxu0 0.0
    %1014 = vmatpush.xpose.msra.mxu0 0.0
    %1015 = vmatpush.xpose.msra.mxu0 0.0
    %1016 = vmatpush.xpose.msra.mxu0 0.0
    %1017 = vmatpush.xpose.msra.mxu0 0.0
    %1018 = vmatpush.xpose.msra.mxu0 0.0
    %1019 = vmatpush.xpose.msra.mxu0 0.0
    %1020 = vmatpush.xpose.msra.mxu0 0.0
    %1021 = vmatpush.xpose.msra.mxu0 0.0
    %1022 = vmatpush.xpose.msra.mxu0 0.0
    %1023 = vmatpush.xpose.msra.mxu0 0.0
    %1024 = vmatpush.xpose.msra.mxu0 0.0
    %1025 = vmatpush.xpose.msra.mxu0 0.0
    %1026 = vmatpush.xpose.msra.mxu0 %v177
    %1027 = vmatpush.xpose.msra.mxu0 %v81
    %1028 = vmatmul.f32.gmra.mxu0 %v310
    %v1029 = vpop.f32.mrf.mxu0
    %v1030 = vadd.f32 %v1010, %v1029
    %1031 = vdwg.mxu0
    %1032 = vmatpush.xpose.msra.mxu0 0.0
    %1033 = vmatpush.xpose.msra.mxu0 0.0
    %1034 = vmatpush.xpose.msra.mxu0 0.0
    %1035 = vmatpush.xpose.msra.mxu0 0.0
    %1036 = vmatpush.xpose.msra.mxu0 0.0
    %1037 = vmatpush.xpose.msra.mxu0 0.0
    %1038 = vmatpush.xpose.msra.mxu0 0.0
    %1039 = vmatpush.xpose.msra.mxu0 0.0
    %1040 = vmatpush.xpose.msra.mxu0 0.0
    %1041 = vmatpush.xpose.msra.mxu0 0.0
    %1042 = vmatpush.xpose.msra.mxu0 0.0
    %1043 = vmatpush.xpose.msra.mxu0 0.0
    %1044 = vmatpush.xpose.msra.mxu0 0.0
    %1045 = vmatpush.xpose.msra.mxu0 0.0
    %1046 = vmatpush.xpose.msra.mxu0 %v178
    %1047 = vmatpush.xpose.msra.mxu0 %v82
    %1048 = vmatmul.f32.gmra.mxu0 %v311
    %v1049 = vpop.f32.mrf.mxu0
    %v1050 = vadd.f32 %v1030, %v1049
    %1051 = vdwg.mxu0
    %1052 = vmatpush.xpose.msra.mxu0 0.0
    %1053 = vmatpush.xpose.msra.mxu0 0.0
    %1054 = vmatpush.xpose.msra.mxu0 0.0
    %1055 = vmatpush.xpose.msra.mxu0 0.0
    %1056 = vmatpush.xpose.msra.mxu0 0.0
    %1057 = vmatpush.xpose.msra.mxu0 0.0
    %1058 = vmatpush.xpose.msra.mxu0 0.0
    %1059 = vmatpush.xpose.msra.mxu0 0.0
    %1060 = vmatpush.xpose.msra.mxu0 0.0
    %1061 = vmatpush.xpose.msra.mxu0 0.0
    %1062 = vmatpush.xpose.msra.mxu0 0.0
    %1063 = vmatpush.xpose.msra.mxu0 0.0
    %1064 = vmatpush.xpose.msra.mxu0 0.0
    %1065 = vmatpush.xpose.msra.mxu0 0.0
    %1066 = vmatpush.xpose.msra.mxu0 %v179
    %1067 = vmatpush.xpose.msra.mxu0 %v83
    %1068 = vmatmul.f32.gmra.mxu0 %v312
    %v1069 = vpop.f32.mrf.mxu0
    %v1070 = vadd.f32 %v1050, %v1069
    %1071 = vdwg.mxu0
    %1072 = vmatpush.xpose.msra.mxu0 0.0
    %1073 = vmatpush.xpose.msra.mxu0 0.0
    %1074 = vmatpush.xpose.msra.mxu0 0.0
    %1075 = vmatpush.xpose.msra.mxu0 0.0
    %1076 = vmatpush.xpose.msra.mxu0 0.0
    %1077 = vmatpush.xpose.msra.mxu0 0.0
    %1078 = vmatpush.xpose.msra.mxu0 0.0
    %1079 = vmatpush.xpose.msra.mxu0 0.0
    %1080 = vmatpush.xpose.msra.mxu0 0.0
    %1081 = vmatpush.xpose.msra.mxu0 0.0
    %1082 = vmatpush.xpose.msra.mxu0 0.0
    %1083 = vmatpush.xpose.msra.mxu0 0.0
    %1084 = vmatpush.xpose.msra.mxu0 0.0
    %1085 = vmatpush.xpose.msra.mxu0 0.0
    %1086 = vmatpush.xpose.msra.mxu0 %v180
    %1087 = vmatpush.xpose.msra.mxu0 %v84
    %1088 = vmatmul.f32.gmra.mxu0 %v313
    %v1089 = vpop.f32.mrf.mxu0
    %v1090 = vadd.f32 %v1070, %v1089
    %1091 = vdwg.mxu0
    %1092 = vmatpush.xpose.msra.mxu0 0.0
    %1093 = vmatpush.xpose.msra.mxu0 0.0
    %1094 = vmatpush.xpose.msra.mxu0 0.0
    %1095 = vmatpush.xpose.msra.mxu0 0.0
    %1096 = vmatpush.xpose.msra.mxu0 0.0
    %1097 = vmatpush.xpose.msra.mxu0 0.0
    %1098 = vmatpush.xpose.msra.mxu0 0.0
    %1099 = vmatpush.xpose.msra.mxu0 0.0
    %1100 = vmatpush.xpose.msra.mxu0 0.0
    %1101 = vmatpush.xpose.msra.mxu0 0.0
    %1102 = vmatpush.xpose.msra.mxu0 0.0
    %1103 = vmatpush.xpose.msra.mxu0 0.0
    %1104 = vmatpush.xpose.msra.mxu0 0.0
    %1105 = vmatpush.xpose.msra.mxu0 0.0
    %1106 = vmatpush.xpose.msra.mxu0 %v181
    %1107 = vmatpush.xpose.msra.mxu0 %v85
    %1108 = vmatmul.f32.gmra.mxu0 %v314
    %v1109 = vpop.f32.mrf.mxu0
    %v1110 = vadd.f32 %v1090, %v1109
    %1111 = vdwg.mxu0
    %1112 = vmatpush.xpose.msra.mxu0 0.0
    %1113 = vmatpush.xpose.msra.mxu0 0.0
    %1114 = vmatpush.xpose.msra.mxu0 0.0
    %1115 = vmatpush.xpose.msra.mxu0 0.0
    %1116 = vmatpush.xpose.msra.mxu0 0.0
    %1117 = vmatpush.xpose.msra.mxu0 0.0
    %1118 = vmatpush.xpose.msra.mxu0 0.0
    %1119 = vmatpush.xpose.msra.mxu0 0.0
    %1120 = vmatpush.xpose.msra.mxu0 0.0
    %1121 = vmatpush.xpose.msra.mxu0 0.0
    %1122 = vmatpush.xpose.msra.mxu0 0.0
    %1123 = vmatpush.xpose.msra.mxu0 0.0
    %1124 = vmatpush.xpose.msra.mxu0 0.0
    %1125 = vmatpush.xpose.msra.mxu0 0.0
    %1126 = vmatpush.xpose.msra.mxu0 %v182
    %1127 = vmatpush.xpose.msra.mxu0 %v86
    %1128 = vmatmul.f32.gmra.mxu0 %v315
    %v1129 = vpop.f32.mrf.mxu0
    %v1130 = vadd.f32 %v1110, %v1129
    %1131 = vdwg.mxu0
    %1132 = vmatpush.xpose.msra.mxu0 0.0
    %1133 = vmatpush.xpose.msra.mxu0 0.0
    %1134 = vmatpush.xpose.msra.mxu0 0.0
    %1135 = vmatpush.xpose.msra.mxu0 0.0
    %1136 = vmatpush.xpose.msra.mxu0 0.0
    %1137 = vmatpush.xpose.msra.mxu0 0.0
    %1138 = vmatpush.xpose.msra.mxu0 0.0
    %1139 = vmatpush.xpose.msra.mxu0 0.0
    %1140 = vmatpush.xpose.msra.mxu0 0.0
    %1141 = vmatpush.xpose.msra.mxu0 0.0
    %1142 = vmatpush.xpose.msra.mxu0 0.0
    %1143 = vmatpush.xpose.msra.mxu0 0.0
    %1144 = vmatpush.xpose.msra.mxu0 0.0
    %1145 = vmatpush.xpose.msra.mxu0 0.0
    %1146 = vmatpush.xpose.msra.mxu0 %v183
    %1147 = vmatpush.xpose.msra.mxu0 %v87
    %1148 = vmatmul.f32.gmra.mxu0 %v318
    %v1149 = vpop.f32.mrf.mxu0
    %v1150 = vadd.f32 %v1130, %v1149
    %1151 = vdwg.mxu0
    %1152 = vmatpush.xpose.msra.mxu0 0.0
    %1153 = vmatpush.xpose.msra.mxu0 0.0
    %1154 = vmatpush.xpose.msra.mxu0 0.0
    %1155 = vmatpush.xpose.msra.mxu0 0.0
    %1156 = vmatpush.xpose.msra.mxu0 0.0
    %1157 = vmatpush.xpose.msra.mxu0 0.0
    %1158 = vmatpush.xpose.msra.mxu0 0.0
    %1159 = vmatpush.xpose.msra.mxu0 0.0
    %1160 = vmatpush.xpose.msra.mxu0 0.0
    %1161 = vmatpush.xpose.msra.mxu0 0.0
    %1162 = vmatpush.xpose.msra.mxu0 0.0
    %1163 = vmatpush.xpose.msra.mxu0 0.0
    %1164 = vmatpush.xpose.msra.mxu0 0.0
    %1165 = vmatpush.xpose.msra.mxu0 0.0
    %1166 = vmatpush.xpose.msra.mxu0 %v184
    %1167 = vmatpush.xpose.msra.mxu0 %v88
    %1168 = vmatmul.f32.gmra.mxu0 %v319
    %v1169 = vpop.f32.mrf.mxu0
    %v1170 = vadd.f32 %v1150, %v1169
    %1171 = vdwg.mxu0
    %1172 = vmatpush.xpose.msra.mxu0 0.0
    %1173 = vmatpush.xpose.msra.mxu0 0.0
    %1174 = vmatpush.xpose.msra.mxu0 0.0
    %1175 = vmatpush.xpose.msra.mxu0 0.0
    %1176 = vmatpush.xpose.msra.mxu0 0.0
    %1177 = vmatpush.xpose.msra.mxu0 0.0
    %1178 = vmatpush.xpose.msra.mxu0 0.0
    %1179 = vmatpush.xpose.msra.mxu0 0.0
    %1180 = vmatpush.xpose.msra.mxu0 0.0
    %1181 = vmatpush.xpose.msra.mxu0 0.0
    %1182 = vmatpush.xpose.msra.mxu0 0.0
    %1183 = vmatpush.xpose.msra.mxu0 0.0
    %1184 = vmatpush.xpose.msra.mxu0 0.0
    %1185 = vmatpush.xpose.msra.mxu0 0.0
    %1186 = vmatpush.xpose.msra.mxu0 %v185
    %1187 = vmatpush.xpose.msra.mxu0 %v89
    %1188 = vmatmul.f32.gmra.mxu0 %v320
    %v1189 = vpop.f32.mrf.mxu0
    %v1190 = vadd.f32 %v1170, %v1189
    %1191 = vdwg.mxu0
    %1192 = vmatpush.xpose.msra.mxu0 0.0
    %1193 = vmatpush.xpose.msra.mxu0 0.0
    %1194 = vmatpush.xpose.msra.mxu0 0.0
    %1195 = vmatpush.xpose.msra.mxu0 0.0
    %1196 = vmatpush.xpose.msra.mxu0 0.0
    %1197 = vmatpush.xpose.msra.mxu0 0.0
    %1198 = vmatpush.xpose.msra.mxu0 0.0
    %1199 = vmatpush.xpose.msra.mxu0 0.0
    %1200 = vmatpush.xpose.msra.mxu0 0.0
    %1201 = vmatpush.xpose.msra.mxu0 0.0
    %1202 = vmatpush.xpose.msra.mxu0 0.0
    %1203 = vmatpush.xpose.msra.mxu0 0.0
    %1204 = vmatpush.xpose.msra.mxu0 0.0
    %1205 = vmatpush.xpose.msra.mxu0 0.0
    %1206 = vmatpush.xpose.msra.mxu0 %v186
    %1207 = vmatpush.xpose.msra.mxu0 %v90
    %1208 = vmatmul.f32.gmra.mxu0 %v321
    %v1209 = vpop.f32.mrf.mxu0
    %v1210 = vadd.f32 %v1190, %v1209
    %1211 = vdwg.mxu0
    %1212 = vmatpush.xpose.msra.mxu0 0.0
    %1213 = vmatpush.xpose.msra.mxu0 0.0
    %1214 = vmatpush.xpose.msra.mxu0 0.0
    %1215 = vmatpush.xpose.msra.mxu0 0.0
    %1216 = vmatpush.xpose.msra.mxu0 0.0
    %1217 = vmatpush.xpose.msra.mxu0 0.0
    %1218 = vmatpush.xpose.msra.mxu0 0.0
    %1219 = vmatpush.xpose.msra.mxu0 0.0
    %1220 = vmatpush.xpose.msra.mxu0 0.0
    %1221 = vmatpush.xpose.msra.mxu0 0.0
    %1222 = vmatpush.xpose.msra.mxu0 0.0
    %1223 = vmatpush.xpose.msra.mxu0 0.0
    %1224 = vmatpush.xpose.msra.mxu0 0.0
    %1225 = vmatpush.xpose.msra.mxu0 0.0
    %1226 = vmatpush.xpose.msra.mxu0 %v187
    %1227 = vmatpush.xpose.msra.mxu0 %v91
    %1228 = vmatmul.f32.gmra.mxu0 %v322
    %v1229 = vpop.f32.mrf.mxu0
    %v1230 = vadd.f32 %v1210, %v1229
    %1231 = vdwg.mxu0
    %1232 = vmatpush.xpose.msra.mxu0 0.0
    %1233 = vmatpush.xpose.msra.mxu0 0.0
    %1234 = vmatpush.xpose.msra.mxu0 0.0
    %1235 = vmatpush.xpose.msra.mxu0 0.0
    %1236 = vmatpush.xpose.msra.mxu0 0.0
    %1237 = vmatpush.xpose.msra.mxu0 0.0
    %1238 = vmatpush.xpose.msra.mxu0 0.0
    %1239 = vmatpush.xpose.msra.mxu0 0.0
    %1240 = vmatpush.xpose.msra.mxu0 0.0
    %1241 = vmatpush.xpose.msra.mxu0 0.0
    %1242 = vmatpush.xpose.msra.mxu0 0.0
    %1243 = vmatpush.xpose.msra.mxu0 0.0
    %1244 = vmatpush.xpose.msra.mxu0 0.0
    %1245 = vmatpush.xpose.msra.mxu0 0.0
    %1246 = vmatpush.xpose.msra.mxu0 %v188
    %1247 = vmatpush.xpose.msra.mxu0 %v92
    %1248 = vmatmul.f32.gmra.mxu0 %v323
    %v1249 = vpop.f32.mrf.mxu0
    %v1250 = vadd.f32 %v1230, %v1249
    %1251 = vdwg.mxu0
    %1252 = vmatpush.xpose.msra.mxu0 0.0
    %1253 = vmatpush.xpose.msra.mxu0 0.0
    %1254 = vmatpush.xpose.msra.mxu0 0.0
    %1255 = vmatpush.xpose.msra.mxu0 0.0
    %1256 = vmatpush.xpose.msra.mxu0 0.0
    %1257 = vmatpush.xpose.msra.mxu0 0.0
    %1258 = vmatpush.xpose.msra.mxu0 0.0
    %1259 = vmatpush.xpose.msra.mxu0 0.0
    %1260 = vmatpush.xpose.msra.mxu0 0.0
    %1261 = vmatpush.xpose.msra.mxu0 0.0
    %1262 = vmatpush.xpose.msra.mxu0 0.0
    %1263 = vmatpush.xpose.msra.mxu0 0.0
    %1264 = vmatpush.xpose.msra.mxu0 0.0
    %1265 = vmatpush.xpose.msra.mxu0 0.0
    %1266 = vmatpush.xpose.msra.mxu0 %v189
    %1267 = vmatpush.xpose.msra.mxu0 %v93
    %1268 = vmatmul.f32.gmra.mxu0 %v324
    %v1269 = vpop.f32.mrf.mxu0
    %v1270 = vadd.f32 %v1250, %v1269
    %1271 = vdwg.mxu0
    %1272 = vmatpush.xpose.msra.mxu0 0.0
    %1273 = vmatpush.xpose.msra.mxu0 0.0
    %1274 = vmatpush.xpose.msra.mxu0 0.0
    %1275 = vmatpush.xpose.msra.mxu0 0.0
    %1276 = vmatpush.xpose.msra.mxu0 0.0
    %1277 = vmatpush.xpose.msra.mxu0 0.0
    %1278 = vmatpush.xpose.msra.mxu0 0.0
    %1279 = vmatpush.xpose.msra.mxu0 0.0
    %1280 = vmatpush.xpose.msra.mxu0 0.0
    %1281 = vmatpush.xpose.msra.mxu0 0.0
    %1282 = vmatpush.xpose.msra.mxu0 0.0
    %1283 = vmatpush.xpose.msra.mxu0 0.0
    %1284 = vmatpush.xpose.msra.mxu0 0.0
    %1285 = vmatpush.xpose.msra.mxu0 0.0
    %1286 = vmatpush.xpose.msra.mxu0 %v190
    %1287 = vmatpush.xpose.msra.mxu0 %v94
    %1288 = vmatmul.f32.gmra.mxu0 %v325
    %v1289 = vpop.f32.mrf.mxu0
    %v1290 = vadd.f32 %v1270, %v1289
    %1291 = vdwg.mxu0
    %1292 = vmatpush.xpose.msra.mxu0 0.0
    %1293 = vmatpush.xpose.msra.mxu0 0.0
    %1294 = vmatpush.xpose.msra.mxu0 0.0
    %1295 = vmatpush.xpose.msra.mxu0 0.0
    %1296 = vmatpush.xpose.msra.mxu0 0.0
    %1297 = vmatpush.xpose.msra.mxu0 0.0
    %1298 = vmatpush.xpose.msra.mxu0 0.0
    %1299 = vmatpush.xpose.msra.mxu0 0.0
    %1300 = vmatpush.xpose.msra.mxu0 0.0
    %1301 = vmatpush.xpose.msra.mxu0 0.0
    %1302 = vmatpush.xpose.msra.mxu0 0.0
    %1303 = vmatpush.xpose.msra.mxu0 0.0
    %1304 = vmatpush.xpose.msra.mxu0 0.0
    %1305 = vmatpush.xpose.msra.mxu0 0.0
    %1306 = vmatpush.xpose.msra.mxu0 %v191
    %1307 = vmatpush.xpose.msra.mxu0 %v95
    %1308 = vmatmul.f32.gmra.mxu0 %v328
    %v1309 = vpop.f32.mrf.mxu0
    %v1310 = vadd.f32 %v1290, %v1309
    %1311 = vdwg.mxu0
    %1312 = vmatpush.xpose.msra.mxu0 0.0
    %1313 = vmatpush.xpose.msra.mxu0 0.0
    %1314 = vmatpush.xpose.msra.mxu0 0.0
    %1315 = vmatpush.xpose.msra.mxu0 0.0
    %1316 = vmatpush.xpose.msra.mxu0 0.0
    %1317 = vmatpush.xpose.msra.mxu0 0.0
    %1318 = vmatpush.xpose.msra.mxu0 0.0
    %1319 = vmatpush.xpose.msra.mxu0 0.0
    %1320 = vmatpush.xpose.msra.mxu0 0.0
    %1321 = vmatpush.xpose.msra.mxu0 0.0
    %1322 = vmatpush.xpose.msra.mxu0 0.0
    %1323 = vmatpush.xpose.msra.mxu0 0.0
    %1324 = vmatpush.xpose.msra.mxu0 0.0
    %1325 = vmatpush.xpose.msra.mxu0 0.0
    %1326 = vmatpush.xpose.msra.mxu0 %v192
    %1327 = vmatpush.xpose.msra.mxu0 %v96
    %1328 = vmatmul.f32.gmra.mxu0 %v329
    %v1329 = vpop.f32.mrf.mxu0
    %v1330 = vadd.f32 %v1310, %v1329
    %1331 = vdwg.mxu0
    %1332 = vmatpush.xpose.msra.mxu0 0.0
    %1333 = vmatpush.xpose.msra.mxu0 0.0
    %1334 = vmatpush.xpose.msra.mxu0 0.0
    %1335 = vmatpush.xpose.msra.mxu0 0.0
    %1336 = vmatpush.xpose.msra.mxu0 0.0
    %1337 = vmatpush.xpose.msra.mxu0 0.0
    %1338 = vmatpush.xpose.msra.mxu0 0.0
    %1339 = vmatpush.xpose.msra.mxu0 0.0
    %1340 = vmatpush.xpose.msra.mxu0 0.0
    %1341 = vmatpush.xpose.msra.mxu0 0.0
    %1342 = vmatpush.xpose.msra.mxu0 0.0
    %1343 = vmatpush.xpose.msra.mxu0 0.0
    %1344 = vmatpush.xpose.msra.mxu0 0.0
    %1345 = vmatpush.xpose.msra.mxu0 0.0
    %1346 = vmatpush.xpose.msra.mxu0 %v193
    %1347 = vmatpush.xpose.msra.mxu0 %v97
    %1348 = vmatmul.f32.gmra.mxu0 %v330
    %v1349 = vpop.f32.mrf.mxu0
    %v1350 = vadd.f32 %v1330, %v1349
    %1351 = vdwg.mxu0
    %1352 = vmatpush.xpose.msra.mxu0 0.0
    %1353 = vmatpush.xpose.msra.mxu0 0.0
    %1354 = vmatpush.xpose.msra.mxu0 0.0
    %1355 = vmatpush.xpose.msra.mxu0 0.0
    %1356 = vmatpush.xpose.msra.mxu0 0.0
    %1357 = vmatpush.xpose.msra.mxu0 0.0
    %1358 = vmatpush.xpose.msra.mxu0 0.0
    %1359 = vmatpush.xpose.msra.mxu0 0.0
    %1360 = vmatpush.xpose.msra.mxu0 0.0
    %1361 = vmatpush.xpose.msra.mxu0 0.0
    %1362 = vmatpush.xpose.msra.mxu0 0.0
    %1363 = vmatpush.xpose.msra.mxu0 0.0
    %1364 = vmatpush.xpose.msra.mxu0 0.0
    %1365 = vmatpush.xpose.msra.mxu0 0.0
    %1366 = vmatpush.xpose.msra.mxu0 %v194
    %1367 = vmatpush.xpose.msra.mxu0 %v98
    %1368 = vmatmul.f32.gmra.mxu0 %v331
    %v1369 = vpop.f32.mrf.mxu0
    %v1370 = vadd.f32 %v1350, %v1369
    %1371 = vdwg.mxu0
    %1372 = vmatpush.xpose.msra.mxu0 0.0
    %1373 = vmatpush.xpose.msra.mxu0 0.0
    %1374 = vmatpush.xpose.msra.mxu0 0.0
    %1375 = vmatpush.xpose.msra.mxu0 0.0
    %1376 = vmatpush.xpose.msra.mxu0 0.0
    %1377 = vmatpush.xpose.msra.mxu0 0.0
    %1378 = vmatpush.xpose.msra.mxu0 0.0
    %1379 = vmatpush.xpose.msra.mxu0 0.0
    %1380 = vmatpush.xpose.msra.mxu0 0.0
    %1381 = vmatpush.xpose.msra.mxu0 0.0
    %1382 = vmatpush.xpose.msra.mxu0 0.0
    %1383 = vmatpush.xpose.msra.mxu0 0.0
    %1384 = vmatpush.xpose.msra.mxu0 0.0
    %1385 = vmatpush.xpose.msra.mxu0 0.0
    %1386 = vmatpush.xpose.msra.mxu0 %v195
    %1387 = vmatpush.xpose.msra.mxu0 %v99
    %1388 = vmatmul.f32.gmra.mxu0 %v332
    %v1389 = vpop.f32.mrf.mxu0
    %v1390 = vadd.f32 %v1370, %v1389
    %1391 = vdwg.mxu0
    %1392 = vmatpush.xpose.msra.mxu0 0.0
    %1393 = vmatpush.xpose.msra.mxu0 0.0
    %1394 = vmatpush.xpose.msra.mxu0 0.0
    %1395 = vmatpush.xpose.msra.mxu0 0.0
    %1396 = vmatpush.xpose.msra.mxu0 0.0
    %1397 = vmatpush.xpose.msra.mxu0 0.0
    %1398 = vmatpush.xpose.msra.mxu0 0.0
    %1399 = vmatpush.xpose.msra.mxu0 0.0
    %1400 = vmatpush.xpose.msra.mxu0 0.0
    %1401 = vmatpush.xpose.msra.mxu0 0.0
    %1402 = vmatpush.xpose.msra.mxu0 0.0
    %1403 = vmatpush.xpose.msra.mxu0 0.0
    %1404 = vmatpush.xpose.msra.mxu0 0.0
    %1405 = vmatpush.xpose.msra.mxu0 0.0
    %1406 = vmatpush.xpose.msra.mxu0 %v196
    %1407 = vmatpush.xpose.msra.mxu0 %v100
    %1408 = vmatmul.f32.gmra.mxu0 %v333
    %v1409 = vpop.f32.mrf.mxu0
    %v1410 = vadd.f32 %v1390, %v1409
    %1411 = vdwg.mxu0
    %1412 = vmatpush.xpose.msra.mxu0 0.0
    %1413 = vmatpush.xpose.msra.mxu0 0.0
    %1414 = vmatpush.xpose.msra.mxu0 0.0
    %1415 = vmatpush.xpose.msra.mxu0 0.0
    %1416 = vmatpush.xpose.msra.mxu0 0.0
    %1417 = vmatpush.xpose.msra.mxu0 0.0
    %1418 = vmatpush.xpose.msra.mxu0 0.0
    %1419 = vmatpush.xpose.msra.mxu0 0.0
    %1420 = vmatpush.xpose.msra.mxu0 0.0
    %1421 = vmatpush.xpose.msra.mxu0 0.0
    %1422 = vmatpush.xpose.msra.mxu0 0.0
    %1423 = vmatpush.xpose.msra.mxu0 0.0
    %1424 = vmatpush.xpose.msra.mxu0 0.0
    %1425 = vmatpush.xpose.msra.mxu0 0.0
    %1426 = vmatpush.xpose.msra.mxu0 %v197
    %1427 = vmatpush.xpose.msra.mxu0 %v101
    %1428 = vmatmul.f32.gmra.mxu0 %v334
    %v1429 = vpop.f32.mrf.mxu0
    %v1430 = vadd.f32 %v1410, %v1429
    %1431 = vdwg.mxu0
    %1432 = vmatpush.xpose.msra.mxu0 0.0
    %1433 = vmatpush.xpose.msra.mxu0 0.0
    %1434 = vmatpush.xpose.msra.mxu0 0.0
    %1435 = vmatpush.xpose.msra.mxu0 0.0
    %1436 = vmatpush.xpose.msra.mxu0 0.0
    %1437 = vmatpush.xpose.msra.mxu0 0.0
    %1438 = vmatpush.xpose.msra.mxu0 0.0
    %1439 = vmatpush.xpose.msra.mxu0 0.0
    %1440 = vmatpush.xpose.msra.mxu0 0.0
    %1441 = vmatpush.xpose.msra.mxu0 0.0
    %1442 = vmatpush.xpose.msra.mxu0 0.0
    %1443 = vmatpush.xpose.msra.mxu0 0.0
    %1444 = vmatpush.xpose.msra.mxu0 0.0
    %1445 = vmatpush.xpose.msra.mxu0 0.0
    %1446 = vmatpush.xpose.msra.mxu0 %v198
    %1447 = vmatpush.xpose.msra.mxu0 %v102
    %1448 = vmatmul.f32.gmra.mxu0 %v335
    %v1449 = vpop.f32.mrf.mxu0
    %v1450 = vadd.f32 %v1430, %v1449
    %1451 = vdwg.mxu0
    %1452 = vmatpush.xpose.msra.mxu0 0.0
    %1453 = vmatpush.xpose.msra.mxu0 0.0
    %1454 = vmatpush.xpose.msra.mxu0 0.0
    %1455 = vmatpush.xpose.msra.mxu0 0.0
    %1456 = vmatpush.xpose.msra.mxu0 0.0
    %1457 = vmatpush.xpose.msra.mxu0 0.0
    %1458 = vmatpush.xpose.msra.mxu0 0.0
    %1459 = vmatpush.xpose.msra.mxu0 0.0
    %1460 = vmatpush.xpose.msra.mxu0 0.0
    %1461 = vmatpush.xpose.msra.mxu0 0.0
    %1462 = vmatpush.xpose.msra.mxu0 0.0
    %1463 = vmatpush.xpose.msra.mxu0 0.0
    %1464 = vmatpush.xpose.msra.mxu0 0.0
    %1465 = vmatpush.xpose.msra.mxu0 0.0
    %1466 = vmatpush.xpose.msra.mxu0 %v199
    %1467 = vmatpush.xpose.msra.mxu0 %v103
    %1468 = vmatmul.f32.gmra.mxu0 %v338
    %v1469 = vpop.f32.mrf.mxu0
    %v1470 = vadd.f32 %v1450, %v1469
    %1471 = vdwg.mxu0
    %1472 = vmatpush.xpose.msra.mxu0 0.0
    %1473 = vmatpush.xpose.msra.mxu0 0.0
    %1474 = vmatpush.xpose.msra.mxu0 0.0
    %1475 = vmatpush.xpose.msra.mxu0 0.0
    %1476 = vmatpush.xpose.msra.mxu0 0.0
    %1477 = vmatpush.xpose.msra.mxu0 0.0
    %1478 = vmatpush.xpose.msra.mxu0 0.0
    %1479 = vmatpush.xpose.msra.mxu0 0.0
    %1480 = vmatpush.xpose.msra.mxu0 0.0
    %1481 = vmatpush.xpose.msra.mxu0 0.0
    %1482 = vmatpush.xpose.msra.mxu0 0.0
    %1483 = vmatpush.xpose.msra.mxu0 0.0
    %1484 = vmatpush.xpose.msra.mxu0 0.0
    %1485 = vmatpush.xpose.msra.mxu0 0.0
    %1486 = vmatpush.xpose.msra.mxu0 %v200
    %1487 = vmatpush.xpose.msra.mxu0 %v104
    %1488 = vmatmul.f32.gmra.mxu0 %v339
    %v1489 = vpop.f32.mrf.mxu0
    %v1490 = vadd.f32 %v1470, %v1489
    %1491 = vdwg.mxu0
    %1492 = vmatpush.xpose.msra.mxu0 0.0
    %1493 = vmatpush.xpose.msra.mxu0 0.0
    %1494 = vmatpush.xpose.msra.mxu0 0.0
    %1495 = vmatpush.xpose.msra.mxu0 0.0
    %1496 = vmatpush.xpose.msra.mxu0 0.0
    %1497 = vmatpush.xpose.msra.mxu0 0.0
    %1498 = vmatpush.xpose.msra.mxu0 0.0
    %1499 = vmatpush.xpose.msra.mxu0 0.0
    %1500 = vmatpush.xpose.msra.mxu0 0.0
    %1501 = vmatpush.xpose.msra.mxu0 0.0
    %1502 = vmatpush.xpose.msra.mxu0 0.0
    %1503 = vmatpush.xpose.msra.mxu0 0.0
    %1504 = vmatpush.xpose.msra.mxu0 0.0
    %1505 = vmatpush.xpose.msra.mxu0 0.0
    %1506 = vmatpush.xpose.msra.mxu0 %v201
    %1507 = vmatpush.xpose.msra.mxu0 %v105
    %1508 = vmatmul.f32.gmra.mxu0 %v340
    %v1509 = vpop.f32.mrf.mxu0
    %v1510 = vadd.f32 %v1490, %v1509
    %1511 = vdwg.mxu0
    %1512 = vmatpush.xpose.msra.mxu0 0.0
    %1513 = vmatpush.xpose.msra.mxu0 0.0
    %1514 = vmatpush.xpose.msra.mxu0 0.0
    %1515 = vmatpush.xpose.msra.mxu0 0.0
    %1516 = vmatpush.xpose.msra.mxu0 0.0
    %1517 = vmatpush.xpose.msra.mxu0 0.0
    %1518 = vmatpush.xpose.msra.mxu0 0.0
    %1519 = vmatpush.xpose.msra.mxu0 0.0
    %1520 = vmatpush.xpose.msra.mxu0 0.0
    %1521 = vmatpush.xpose.msra.mxu0 0.0
    %1522 = vmatpush.xpose.msra.mxu0 0.0
    %1523 = vmatpush.xpose.msra.mxu0 0.0
    %1524 = vmatpush.xpose.msra.mxu0 0.0
    %1525 = vmatpush.xpose.msra.mxu0 0.0
    %1526 = vmatpush.xpose.msra.mxu0 %v202
    %1527 = vmatpush.xpose.msra.mxu0 %v106
    %1528 = vmatmul.f32.gmra.mxu0 %v341
    %v1529 = vpop.f32.mrf.mxu0
    %v1530 = vadd.f32 %v1510, %v1529
    %1531 = vdwg.mxu0
    %1532 = vmatpush.xpose.msra.mxu0 0.0
    %1533 = vmatpush.xpose.msra.mxu0 0.0
    %1534 = vmatpush.xpose.msra.mxu0 0.0
    %1535 = vmatpush.xpose.msra.mxu0 0.0
    %1536 = vmatpush.xpose.msra.mxu0 0.0
    %1537 = vmatpush.xpose.msra.mxu0 0.0
    %1538 = vmatpush.xpose.msra.mxu0 0.0
    %1539 = vmatpush.xpose.msra.mxu0 0.0
    %1540 = vmatpush.xpose.msra.mxu0 0.0
    %1541 = vmatpush.xpose.msra.mxu0 0.0
    %1542 = vmatpush.xpose.msra.mxu0 0.0
    %1543 = vmatpush.xpose.msra.mxu0 0.0
    %1544 = vmatpush.xpose.msra.mxu0 0.0
    %1545 = vmatpush.xpose.msra.mxu0 0.0
    %1546 = vmatpush.xpose.msra.mxu0 %v203
    %1547 = vmatpush.xpose.msra.mxu0 %v107
    %1548 = vmatmul.f32.gmra.mxu0 %v342
    %v1549 = vpop.f32.mrf.mxu0
    %v1550 = vadd.f32 %v1530, %v1549
    %1551 = vdwg.mxu0
    %1552 = vmatpush.xpose.msra.mxu0 0.0
    %1553 = vmatpush.xpose.msra.mxu0 0.0
    %1554 = vmatpush.xpose.msra.mxu0 0.0
    %1555 = vmatpush.xpose.msra.mxu0 0.0
    %1556 = vmatpush.xpose.msra.mxu0 0.0
    %1557 = vmatpush.xpose.msra.mxu0 0.0
    %1558 = vmatpush.xpose.msra.mxu0 0.0
    %1559 = vmatpush.xpose.msra.mxu0 0.0
    %1560 = vmatpush.xpose.msra.mxu0 0.0
    %1561 = vmatpush.xpose.msra.mxu0 0.0
    %1562 = vmatpush.xpose.msra.mxu0 0.0
    %1563 = vmatpush.xpose.msra.mxu0 0.0
    %1564 = vmatpush.xpose.msra.mxu0 0.0
    %1565 = vmatpush.xpose.msra.mxu0 0.0
    %1566 = vmatpush.xpose.msra.mxu0 %v204
    %1567 = vmatpush.xpose.msra.mxu0 %v108
    %1568 = vmatmul.f32.gmra.mxu0 %v343
    %v1569 = vpop.f32.mrf.mxu0
    %v1570 = vadd.f32 %v1550, %v1569
    %1571 = vdwg.mxu0
    %1572 = vmatpush.xpose.msra.mxu0 0.0
    %1573 = vmatpush.xpose.msra.mxu0 0.0
    %1574 = vmatpush.xpose.msra.mxu0 0.0
    %1575 = vmatpush.xpose.msra.mxu0 0.0
    %1576 = vmatpush.xpose.msra.mxu0 0.0
    %1577 = vmatpush.xpose.msra.mxu0 0.0
    %1578 = vmatpush.xpose.msra.mxu0 0.0
    %1579 = vmatpush.xpose.msra.mxu0 0.0
    %1580 = vmatpush.xpose.msra.mxu0 0.0
    %1581 = vmatpush.xpose.msra.mxu0 0.0
    %1582 = vmatpush.xpose.msra.mxu0 0.0
    %1583 = vmatpush.xpose.msra.mxu0 0.0
    %1584 = vmatpush.xpose.msra.mxu0 0.0
    %1585 = vmatpush.xpose.msra.mxu0 0.0
    %1586 = vmatpush.xpose.msra.mxu0 %v205
    %1587 = vmatpush.xpose.msra.mxu0 %v109
    %1588 = vmatmul.f32.gmra.mxu0 %v344
    %v1589 = vpop.f32.mrf.mxu0
    %v1590 = vadd.f32 %v1570, %v1589
    %1591 = vdwg.mxu0
    %1592 = vmatpush.xpose.msra.mxu0 0.0
    %1593 = vmatpush.xpose.msra.mxu0 0.0
    %1594 = vmatpush.xpose.msra.mxu0 0.0
    %1595 = vmatpush.xpose.msra.mxu0 0.0
    %1596 = vmatpush.xpose.msra.mxu0 0.0
    %1597 = vmatpush.xpose.msra.mxu0 0.0
    %1598 = vmatpush.xpose.msra.mxu0 0.0
    %1599 = vmatpush.xpose.msra.mxu0 0.0
    %1600 = vmatpush.xpose.msra.mxu0 0.0
    %1601 = vmatpush.xpose.msra.mxu0 0.0
    %1602 = vmatpush.xpose.msra.mxu0 0.0
    %1603 = vmatpush.xpose.msra.mxu0 0.0
    %1604 = vmatpush.xpose.msra.mxu0 0.0
    %1605 = vmatpush.xpose.msra.mxu0 0.0
    %1606 = vmatpush.xpose.msra.mxu0 %v206
    %1607 = vmatpush.xpose.msra.mxu0 %v110
    %1608 = vmatmul.f32.gmra.mxu0 %v345
    %v1609 = vpop.f32.mrf.mxu0
    %v1610 = vadd.f32 %v1590, %v1609
    %1611 = vdwg.mxu0
    %1612 = vmatpush.xpose.msra.mxu0 0.0
    %1613 = vmatpush.xpose.msra.mxu0 0.0
    %1614 = vmatpush.xpose.msra.mxu0 0.0
    %1615 = vmatpush.xpose.msra.mxu0 0.0
    %1616 = vmatpush.xpose.msra.mxu0 0.0
    %1617 = vmatpush.xpose.msra.mxu0 0.0
    %1618 = vmatpush.xpose.msra.mxu0 0.0
    %1619 = vmatpush.xpose.msra.mxu0 0.0
    %1620 = vmatpush.xpose.msra.mxu0 0.0
    %1621 = vmatpush.xpose.msra.mxu0 0.0
    %1622 = vmatpush.xpose.msra.mxu0 0.0
    %1623 = vmatpush.xpose.msra.mxu0 0.0
    %1624 = vmatpush.xpose.msra.mxu0 0.0
    %1625 = vmatpush.xpose.msra.mxu0 0.0
    %1626 = vmatpush.xpose.msra.mxu0 %v207
    %1627 = vmatpush.xpose.msra.mxu0 %v111
    %1628 = vmatmul.f32.gmra.mxu0 %v348
    %v1629 = vpop.f32.mrf.mxu0
    %v1630 = vadd.f32 %v1610, %v1629
    %1631 = vdwg.mxu0
    %1632 = vmatpush.xpose.msra.mxu0 0.0
    %1633 = vmatpush.xpose.msra.mxu0 0.0
    %1634 = vmatpush.xpose.msra.mxu0 0.0
    %1635 = vmatpush.xpose.msra.mxu0 0.0
    %1636 = vmatpush.xpose.msra.mxu0 0.0
    %1637 = vmatpush.xpose.msra.mxu0 0.0
    %1638 = vmatpush.xpose.msra.mxu0 0.0
    %1639 = vmatpush.xpose.msra.mxu0 0.0
    %1640 = vmatpush.xpose.msra.mxu0 0.0
    %1641 = vmatpush.xpose.msra.mxu0 0.0
    %1642 = vmatpush.xpose.msra.mxu0 0.0
    %1643 = vmatpush.xpose.msra.mxu0 0.0
    %1644 = vmatpush.xpose.msra.mxu0 0.0
    %1645 = vmatpush.xpose.msra.mxu0 0.0
    %1646 = vmatpush.xpose.msra.mxu0 %v208
    %1647 = vmatpush.xpose.msra.mxu0 %v112
    %1648 = vmatmul.f32.gmra.mxu0 %v349
    %v1649 = vpop.f32.mrf.mxu0
    %v1650 = vadd.f32 %v1630, %v1649
    %1651 = vdwg.mxu0
    %1652 = vmatpush.xpose.msra.mxu0 0.0
    %1653 = vmatpush.xpose.msra.mxu0 0.0
    %1654 = vmatpush.xpose.msra.mxu0 0.0
    %1655 = vmatpush.xpose.msra.mxu0 0.0
    %1656 = vmatpush.xpose.msra.mxu0 0.0
    %1657 = vmatpush.xpose.msra.mxu0 0.0
    %1658 = vmatpush.xpose.msra.mxu0 0.0
    %1659 = vmatpush.xpose.msra.mxu0 0.0
    %1660 = vmatpush.xpose.msra.mxu0 0.0
    %1661 = vmatpush.xpose.msra.mxu0 0.0
    %1662 = vmatpush.xpose.msra.mxu0 0.0
    %1663 = vmatpush.xpose.msra.mxu0 0.0
    %1664 = vmatpush.xpose.msra.mxu0 0.0
    %1665 = vmatpush.xpose.msra.mxu0 0.0
    %1666 = vmatpush.xpose.msra.mxu0 %v209
    %1667 = vmatpush.xpose.msra.mxu0 %v113
    %1668 = vmatmul.f32.gmra.mxu0 %v350
    %v1669 = vpop.f32.mrf.mxu0
    %v1670 = vadd.f32 %v1650, %v1669
    %1671 = vdwg.mxu0
    %1672 = vmatpush.xpose.msra.mxu0 0.0
    %1673 = vmatpush.xpose.msra.mxu0 0.0
    %1674 = vmatpush.xpose.msra.mxu0 0.0
    %1675 = vmatpush.xpose.msra.mxu0 0.0
    %1676 = vmatpush.xpose.msra.mxu0 0.0
    %1677 = vmatpush.xpose.msra.mxu0 0.0
    %1678 = vmatpush.xpose.msra.mxu0 0.0
    %1679 = vmatpush.xpose.msra.mxu0 0.0
    %1680 = vmatpush.xpose.msra.mxu0 0.0
    %1681 = vmatpush.xpose.msra.mxu0 0.0
    %1682 = vmatpush.xpose.msra.mxu0 0.0
    %1683 = vmatpush.xpose.msra.mxu0 0.0
    %1684 = vmatpush.xpose.msra.mxu0 0.0
    %1685 = vmatpush.xpose.msra.mxu0 0.0
    %1686 = vmatpush.xpose.msra.mxu0 %v210
    %1687 = vmatpush.xpose.msra.mxu0 %v114
    %1688 = vmatmul.f32.gmra.mxu0 %v351
    %v1689 = vpop.f32.mrf.mxu0
    %v1690 = vadd.f32 %v1670, %v1689
    %1691 = vdwg.mxu0
    %1692 = vmatpush.xpose.msra.mxu0 0.0
    %1693 = vmatpush.xpose.msra.mxu0 0.0
    %1694 = vmatpush.xpose.msra.mxu0 0.0
    %1695 = vmatpush.xpose.msra.mxu0 0.0
    %1696 = vmatpush.xpose.msra.mxu0 0.0
    %1697 = vmatpush.xpose.msra.mxu0 0.0
    %1698 = vmatpush.xpose.msra.mxu0 0.0
    %1699 = vmatpush.xpose.msra.mxu0 0.0
    %1700 = vmatpush.xpose.msra.mxu0 0.0
    %1701 = vmatpush.xpose.msra.mxu0 0.0
    %1702 = vmatpush.xpose.msra.mxu0 0.0
    %1703 = vmatpush.xpose.msra.mxu0 0.0
    %1704 = vmatpush.xpose.msra.mxu0 0.0
    %1705 = vmatpush.xpose.msra.mxu0 0.0
    %1706 = vmatpush.xpose.msra.mxu0 %v211
    %1707 = vmatpush.xpose.msra.mxu0 %v115
    %1708 = vmatmul.f32.gmra.mxu0 %v352
    %v1709 = vpop.f32.mrf.mxu0
    %v1710 = vadd.f32 %v1690, %v1709
    %1711 = vdwg.mxu0
    %1712 = vmatpush.xpose.msra.mxu0 0.0
    %1713 = vmatpush.xpose.msra.mxu0 0.0
    %1714 = vmatpush.xpose.msra.mxu0 0.0
    %1715 = vmatpush.xpose.msra.mxu0 0.0
    %1716 = vmatpush.xpose.msra.mxu0 0.0
    %1717 = vmatpush.xpose.msra.mxu0 0.0
    %1718 = vmatpush.xpose.msra.mxu0 0.0
    %1719 = vmatpush.xpose.msra.mxu0 0.0
    %1720 = vmatpush.xpose.msra.mxu0 0.0
    %1721 = vmatpush.xpose.msra.mxu0 0.0
    %1722 = vmatpush.xpose.msra.mxu0 0.0
    %1723 = vmatpush.xpose.msra.mxu0 0.0
    %1724 = vmatpush.xpose.msra.mxu0 0.0
    %1725 = vmatpush.xpose.msra.mxu0 0.0
    %1726 = vmatpush.xpose.msra.mxu0 %v212
    %1727 = vmatpush.xpose.msra.mxu0 %v116
    %1728 = vmatmul.f32.gmra.mxu0 %v353
    %v1729 = vpop.f32.mrf.mxu0
    %v1730 = vadd.f32 %v1710, %v1729
    %1731 = vdwg.mxu0
    %1732 = vmatpush.xpose.msra.mxu0 0.0
    %1733 = vmatpush.xpose.msra.mxu0 0.0
    %1734 = vmatpush.xpose.msra.mxu0 0.0
    %1735 = vmatpush.xpose.msra.mxu0 0.0
    %1736 = vmatpush.xpose.msra.mxu0 0.0
    %1737 = vmatpush.xpose.msra.mxu0 0.0
    %1738 = vmatpush.xpose.msra.mxu0 0.0
    %1739 = vmatpush.xpose.msra.mxu0 0.0
    %1740 = vmatpush.xpose.msra.mxu0 0.0
    %1741 = vmatpush.xpose.msra.mxu0 0.0
    %1742 = vmatpush.xpose.msra.mxu0 0.0
    %1743 = vmatpush.xpose.msra.mxu0 0.0
    %1744 = vmatpush.xpose.msra.mxu0 0.0
    %1745 = vmatpush.xpose.msra.mxu0 0.0
    %1746 = vmatpush.xpose.msra.mxu0 %v213
    %1747 = vmatpush.xpose.msra.mxu0 %v117
    %1748 = vmatmul.f32.gmra.mxu0 %v354
    %v1749 = vpop.f32.mrf.mxu0
    %v1750 = vadd.f32 %v1730, %v1749
    %1751 = vdwg.mxu0
    %1752 = vmatpush.xpose.msra.mxu0 0.0
    %1753 = vmatpush.xpose.msra.mxu0 0.0
    %1754 = vmatpush.xpose.msra.mxu0 0.0
    %1755 = vmatpush.xpose.msra.mxu0 0.0
    %1756 = vmatpush.xpose.msra.mxu0 0.0
    %1757 = vmatpush.xpose.msra.mxu0 0.0
    %1758 = vmatpush.xpose.msra.mxu0 0.0
    %1759 = vmatpush.xpose.msra.mxu0 0.0
    %1760 = vmatpush.xpose.msra.mxu0 0.0
    %1761 = vmatpush.xpose.msra.mxu0 0.0
    %1762 = vmatpush.xpose.msra.mxu0 0.0
    %1763 = vmatpush.xpose.msra.mxu0 0.0
    %1764 = vmatpush.xpose.msra.mxu0 0.0
    %1765 = vmatpush.xpose.msra.mxu0 0.0
    %1766 = vmatpush.xpose.msra.mxu0 %v214
    %1767 = vmatpush.xpose.msra.mxu0 %v118
    %1768 = vmatmul.f32.gmra.mxu0 %v355
    %v1769 = vpop.f32.mrf.mxu0
    %v1770 = vadd.f32 %v1750, %v1769
    %1771 = vdwg.mxu0
    %1772 = vmatpush.xpose.msra.mxu0 0.0
    %1773 = vmatpush.xpose.msra.mxu0 0.0
    %1774 = vmatpush.xpose.msra.mxu0 0.0
    %1775 = vmatpush.xpose.msra.mxu0 0.0
    %1776 = vmatpush.xpose.msra.mxu0 0.0
    %1777 = vmatpush.xpose.msra.mxu0 0.0
    %1778 = vmatpush.xpose.msra.mxu0 0.0
    %1779 = vmatpush.xpose.msra.mxu0 0.0
    %1780 = vmatpush.xpose.msra.mxu0 0.0
    %1781 = vmatpush.xpose.msra.mxu0 0.0
    %1782 = vmatpush.xpose.msra.mxu0 0.0
    %1783 = vmatpush.xpose.msra.mxu0 0.0
    %1784 = vmatpush.xpose.msra.mxu0 0.0
    %1785 = vmatpush.xpose.msra.mxu0 0.0
    %1786 = vmatpush.xpose.msra.mxu0 %v215
    %1787 = vmatpush.xpose.msra.mxu0 %v119
    %1788 = vmatmul.f32.gmra.mxu0 %v358
    %v1789 = vpop.f32.mrf.mxu0
    %v1790 = vadd.f32 %v1770, %v1789
    %1791 = vdwg.mxu0
    %1792 = vmatpush.xpose.msra.mxu0 0.0
    %1793 = vmatpush.xpose.msra.mxu0 0.0
    %1794 = vmatpush.xpose.msra.mxu0 0.0
    %1795 = vmatpush.xpose.msra.mxu0 0.0
    %1796 = vmatpush.xpose.msra.mxu0 0.0
    %1797 = vmatpush.xpose.msra.mxu0 0.0
    %1798 = vmatpush.xpose.msra.mxu0 0.0
    %1799 = vmatpush.xpose.msra.mxu0 0.0
    %1800 = vmatpush.xpose.msra.mxu0 0.0
    %1801 = vmatpush.xpose.msra.mxu0 0.0
    %1802 = vmatpush.xpose.msra.mxu0 0.0
    %1803 = vmatpush.xpose.msra.mxu0 0.0
    %1804 = vmatpush.xpose.msra.mxu0 0.0
    %1805 = vmatpush.xpose.msra.mxu0 0.0
    %1806 = vmatpush.xpose.msra.mxu0 %v216
    %1807 = vmatpush.xpose.msra.mxu0 %v120
    %1808 = vmatmul.f32.gmra.mxu0 %v359
    %v1809 = vpop.f32.mrf.mxu0
    %v1810 = vadd.f32 %v1790, %v1809
    %1811 = vdwg.mxu0
    %1812 = vmatpush.xpose.msra.mxu0 0.0
    %1813 = vmatpush.xpose.msra.mxu0 0.0
    %1814 = vmatpush.xpose.msra.mxu0 0.0
    %1815 = vmatpush.xpose.msra.mxu0 0.0
    %1816 = vmatpush.xpose.msra.mxu0 0.0
    %1817 = vmatpush.xpose.msra.mxu0 0.0
    %1818 = vmatpush.xpose.msra.mxu0 0.0
    %1819 = vmatpush.xpose.msra.mxu0 0.0
    %1820 = vmatpush.xpose.msra.mxu0 0.0
    %1821 = vmatpush.xpose.msra.mxu0 0.0
    %1822 = vmatpush.xpose.msra.mxu0 0.0
    %1823 = vmatpush.xpose.msra.mxu0 0.0
    %1824 = vmatpush.xpose.msra.mxu0 0.0
    %1825 = vmatpush.xpose.msra.mxu0 0.0
    %1826 = vmatpush.xpose.msra.mxu0 %v217
    %1827 = vmatpush.xpose.msra.mxu0 %v121
    %1828 = vmatmul.f32.gmra.mxu0 %v360
    %v1829 = vpop.f32.mrf.mxu0
    %v1830 = vadd.f32 %v1810, %v1829
    %1831 = vdwg.mxu0
    %1832 = vmatpush.xpose.msra.mxu0 0.0
    %1833 = vmatpush.xpose.msra.mxu0 0.0
    %1834 = vmatpush.xpose.msra.mxu0 0.0
    %1835 = vmatpush.xpose.msra.mxu0 0.0
    %1836 = vmatpush.xpose.msra.mxu0 0.0
    %1837 = vmatpush.xpose.msra.mxu0 0.0
    %1838 = vmatpush.xpose.msra.mxu0 0.0
    %1839 = vmatpush.xpose.msra.mxu0 0.0
    %1840 = vmatpush.xpose.msra.mxu0 0.0
    %1841 = vmatpush.xpose.msra.mxu0 0.0
    %1842 = vmatpush.xpose.msra.mxu0 0.0
    %1843 = vmatpush.xpose.msra.mxu0 0.0
    %1844 = vmatpush.xpose.msra.mxu0 0.0
    %1845 = vmatpush.xpose.msra.mxu0 0.0
    %1846 = vmatpush.xpose.msra.mxu0 %v218
    %1847 = vmatpush.xpose.msra.mxu0 %v122
    %1848 = vmatmul.f32.gmra.mxu0 %v361
    %v1849 = vpop.f32.mrf.mxu0
    %v1850 = vadd.f32 %v1830, %v1849
    %1851 = vdwg.mxu0
    %1852 = vmatpush.xpose.msra.mxu0 0.0
    %1853 = vmatpush.xpose.msra.mxu0 0.0
    %1854 = vmatpush.xpose.msra.mxu0 0.0
    %1855 = vmatpush.xpose.msra.mxu0 0.0
    %1856 = vmatpush.xpose.msra.mxu0 0.0
    %1857 = vmatpush.xpose.msra.mxu0 0.0
    %1858 = vmatpush.xpose.msra.mxu0 0.0
    %1859 = vmatpush.xpose.msra.mxu0 0.0
    %1860 = vmatpush.xpose.msra.mxu0 0.0
    %1861 = vmatpush.xpose.msra.mxu0 0.0
    %1862 = vmatpush.xpose.msra.mxu0 0.0
    %1863 = vmatpush.xpose.msra.mxu0 0.0
    %1864 = vmatpush.xpose.msra.mxu0 0.0
    %1865 = vmatpush.xpose.msra.mxu0 0.0
    %1866 = vmatpush.xpose.msra.mxu0 %v219
    %1867 = vmatpush.xpose.msra.mxu0 %v123
    %1868 = vmatmul.f32.gmra.mxu0 %v362
    %v1869 = vpop.f32.mrf.mxu0
    %v1870 = vadd.f32 %v1850, %v1869
    %1871 = vdwg.mxu0
    %1872 = vmatpush.xpose.msra.mxu0 0.0
    %1873 = vmatpush.xpose.msra.mxu0 0.0
    %1874 = vmatpush.xpose.msra.mxu0 0.0
    %1875 = vmatpush.xpose.msra.mxu0 0.0
    %1876 = vmatpush.xpose.msra.mxu0 0.0
    %1877 = vmatpush.xpose.msra.mxu0 0.0
    %1878 = vmatpush.xpose.msra.mxu0 0.0
    %1879 = vmatpush.xpose.msra.mxu0 0.0
    %1880 = vmatpush.xpose.msra.mxu0 0.0
    %1881 = vmatpush.xpose.msra.mxu0 0.0
    %1882 = vmatpush.xpose.msra.mxu0 0.0
    %1883 = vmatpush.xpose.msra.mxu0 0.0
    %1884 = vmatpush.xpose.msra.mxu0 0.0
    %1885 = vmatpush.xpose.msra.mxu0 0.0
    %1886 = vmatpush.xpose.msra.mxu0 %v220
    %1887 = vmatpush.xpose.msra.mxu0 %v124
    %1888 = vmatmul.f32.gmra.mxu0 %v363
    %v1889 = vpop.f32.mrf.mxu0
    %v1890 = vadd.f32 %v1870, %v1889
    %1891 = vdwg.mxu0
    %1892 = vmatpush.xpose.msra.mxu0 0.0
    %1893 = vmatpush.xpose.msra.mxu0 0.0
    %1894 = vmatpush.xpose.msra.mxu0 0.0
    %1895 = vmatpush.xpose.msra.mxu0 0.0
    %1896 = vmatpush.xpose.msra.mxu0 0.0
    %1897 = vmatpush.xpose.msra.mxu0 0.0
    %1898 = vmatpush.xpose.msra.mxu0 0.0
    %1899 = vmatpush.xpose.msra.mxu0 0.0
    %1900 = vmatpush.xpose.msra.mxu0 0.0
    %1901 = vmatpush.xpose.msra.mxu0 0.0
    %1902 = vmatpush.xpose.msra.mxu0 0.0
    %1903 = vmatpush.xpose.msra.mxu0 0.0
    %1904 = vmatpush.xpose.msra.mxu0 0.0
    %1905 = vmatpush.xpose.msra.mxu0 0.0
    %1906 = vmatpush.xpose.msra.mxu0 %v221
    %1907 = vmatpush.xpose.msra.mxu0 %v125
    %1908 = vmatmul.f32.gmra.mxu0 %v364
    %v1909 = vpop.f32.mrf.mxu0
    %v1910 = vadd.f32 %v1890, %v1909
    %1911 = vdwg.mxu0
    %1912 = vmatpush.xpose.msra.mxu0 0.0
    %1913 = vmatpush.xpose.msra.mxu0 0.0
    %1914 = vmatpush.xpose.msra.mxu0 0.0
    %1915 = vmatpush.xpose.msra.mxu0 0.0
    %1916 = vmatpush.xpose.msra.mxu0 0.0
    %1917 = vmatpush.xpose.msra.mxu0 0.0
    %1918 = vmatpush.xpose.msra.mxu0 0.0
    %1919 = vmatpush.xpose.msra.mxu0 0.0
    %1920 = vmatpush.xpose.msra.mxu0 0.0
    %1921 = vmatpush.xpose.msra.mxu0 0.0
    %1922 = vmatpush.xpose.msra.mxu0 0.0
    %1923 = vmatpush.xpose.msra.mxu0 0.0
    %1924 = vmatpush.xpose.msra.mxu0 0.0
    %1925 = vmatpush.xpose.msra.mxu0 0.0
    %1926 = vmatpush.xpose.msra.mxu0 %v222
    %1927 = vmatpush.xpose.msra.mxu0 %v126
    %1928 = vmatmul.f32.gmra.mxu0 %v365
    %v1929 = vpop.f32.mrf.mxu0
    %v1930 = vadd.f32 %v1910, %v1929
    %1931 = vdwg.mxu0
    %1932 = vmatpush.xpose.msra.mxu0 0.0
    %1933 = vmatpush.xpose.msra.mxu0 0.0
    %1934 = vmatpush.xpose.msra.mxu0 0.0
    %1935 = vmatpush.xpose.msra.mxu0 0.0
    %1936 = vmatpush.xpose.msra.mxu0 0.0
    %1937 = vmatpush.xpose.msra.mxu0 0.0
    %1938 = vmatpush.xpose.msra.mxu0 0.0
    %1939 = vmatpush.xpose.msra.mxu0 0.0
    %1940 = vmatpush.xpose.msra.mxu0 0.0
    %1941 = vmatpush.xpose.msra.mxu0 0.0
    %1942 = vmatpush.xpose.msra.mxu0 0.0
    %1943 = vmatpush.xpose.msra.mxu0 0.0
    %1944 = vmatpush.xpose.msra.mxu0 0.0
    %1945 = vmatpush.xpose.msra.mxu0 0.0
    %1946 = vmatpush.xpose.msra.mxu0 %v223
    %1947 = vmatpush.xpose.msra.mxu0 %v127
    %1948 = vmatmul.f32.gmra.mxu0 %v368
    %v1949 = vpop.f32.mrf.mxu0
    %v1950 = vadd.f32 %v1930, %v1949
    %1951 = vdwg.mxu0
    %1952 = vmatpush.xpose.msra.mxu0 0.0
    %1953 = vmatpush.xpose.msra.mxu0 0.0
    %1954 = vmatpush.xpose.msra.mxu0 0.0
    %1955 = vmatpush.xpose.msra.mxu0 0.0
    %1956 = vmatpush.xpose.msra.mxu0 0.0
    %1957 = vmatpush.xpose.msra.mxu0 0.0
    %1958 = vmatpush.xpose.msra.mxu0 0.0
    %1959 = vmatpush.xpose.msra.mxu0 0.0
    %1960 = vmatpush.xpose.msra.mxu0 0.0
    %1961 = vmatpush.xpose.msra.mxu0 0.0
    %1962 = vmatpush.xpose.msra.mxu0 0.0
    %1963 = vmatpush.xpose.msra.mxu0 0.0
    %1964 = vmatpush.xpose.msra.mxu0 0.0
    %1965 = vmatpush.xpose.msra.mxu0 0.0
    %1966 = vmatpush.xpose.msra.mxu0 %v224
    %1967 = vmatpush.xpose.msra.mxu0 %v128
    %1968 = vmatmul.f32.gmra.mxu0 %v369
    %v1969 = vpop.f32.mrf.mxu0
    %v1970 = vadd.f32 %v1950, %v1969
    %1971 = vdwg.mxu0
    %1972 = vmatpush.xpose.msra.mxu0 0.0
    %1973 = vmatpush.xpose.msra.mxu0 0.0
    %1974 = vmatpush.xpose.msra.mxu0 0.0
    %1975 = vmatpush.xpose.msra.mxu0 0.0
    %1976 = vmatpush.xpose.msra.mxu0 0.0
    %1977 = vmatpush.xpose.msra.mxu0 0.0
    %1978 = vmatpush.xpose.msra.mxu0 0.0
    %1979 = vmatpush.xpose.msra.mxu0 0.0
    %1980 = vmatpush.xpose.msra.mxu0 0.0
    %1981 = vmatpush.xpose.msra.mxu0 0.0
    %1982 = vmatpush.xpose.msra.mxu0 0.0
    %1983 = vmatpush.xpose.msra.mxu0 0.0
    %1984 = vmatpush.xpose.msra.mxu0 0.0
    %1985 = vmatpush.xpose.msra.mxu0 0.0
    %1986 = vmatpush.xpose.msra.mxu0 %v225
    %1987 = vmatpush.xpose.msra.mxu0 %v129
    %1988 = vmatmul.f32.gmra.mxu0 %v370
    %v1989 = vpop.f32.mrf.mxu0
    %v1990 = vadd.f32 %v1970, %v1989
    %1991 = vdwg.mxu0
    %1992 = vmatpush.xpose.msra.mxu0 0.0
    %1993 = vmatpush.xpose.msra.mxu0 0.0
    %1994 = vmatpush.xpose.msra.mxu0 0.0
    %1995 = vmatpush.xpose.msra.mxu0 0.0
    %1996 = vmatpush.xpose.msra.mxu0 0.0
    %1997 = vmatpush.xpose.msra.mxu0 0.0
    %1998 = vmatpush.xpose.msra.mxu0 0.0
    %1999 = vmatpush.xpose.msra.mxu0 0.0
    %2000 = vmatpush.xpose.msra.mxu0 0.0
    %2001 = vmatpush.xpose.msra.mxu0 0.0
    %2002 = vmatpush.xpose.msra.mxu0 0.0
    %2003 = vmatpush.xpose.msra.mxu0 0.0
    %2004 = vmatpush.xpose.msra.mxu0 0.0
    %2005 = vmatpush.xpose.msra.mxu0 0.0
    %2006 = vmatpush.xpose.msra.mxu0 %v226
    %2007 = vmatpush.xpose.msra.mxu0 %v130
    %2008 = vmatmul.f32.gmra.mxu0 %v371
    %v2009 = vpop.f32.mrf.mxu0
    %v2010 = vadd.f32 %v1990, %v2009
    %2011 = vdwg.mxu0
    %2012 = vmatpush.xpose.msra.mxu0 0.0
    %2013 = vmatpush.xpose.msra.mxu0 0.0
    %2014 = vmatpush.xpose.msra.mxu0 0.0
    %2015 = vmatpush.xpose.msra.mxu0 0.0
    %2016 = vmatpush.xpose.msra.mxu0 0.0
    %2017 = vmatpush.xpose.msra.mxu0 0.0
    %2018 = vmatpush.xpose.msra.mxu0 0.0
    %2019 = vmatpush.xpose.msra.mxu0 0.0
    %2020 = vmatpush.xpose.msra.mxu0 0.0
    %2021 = vmatpush.xpose.msra.mxu0 0.0
    %2022 = vmatpush.xpose.msra.mxu0 0.0
    %2023 = vmatpush.xpose.msra.mxu0 0.0
    %2024 = vmatpush.xpose.msra.mxu0 0.0
    %2025 = vmatpush.xpose.msra.mxu0 0.0
    %2026 = vmatpush.xpose.msra.mxu0 %v227
    %2027 = vmatpush.xpose.msra.mxu0 %v131
    %2028 = vmatmul.f32.gmra.mxu0 %v372
    %v2029 = vpop.f32.mrf.mxu0
    %v2030 = vadd.f32 %v2010, %v2029
    %2031 = vdwg.mxu0
    %2032 = vmatpush.xpose.msra.mxu0 0.0
    %2033 = vmatpush.xpose.msra.mxu0 0.0
    %2034 = vmatpush.xpose.msra.mxu0 0.0
    %2035 = vmatpush.xpose.msra.mxu0 0.0
    %2036 = vmatpush.xpose.msra.mxu0 0.0
    %2037 = vmatpush.xpose.msra.mxu0 0.0
    %2038 = vmatpush.xpose.msra.mxu0 0.0
    %2039 = vmatpush.xpose.msra.mxu0 0.0
    %2040 = vmatpush.xpose.msra.mxu0 0.0
    %2041 = vmatpush.xpose.msra.mxu0 0.0
    %2042 = vmatpush.xpose.msra.mxu0 0.0
    %2043 = vmatpush.xpose.msra.mxu0 0.0
    %2044 = vmatpush.xpose.msra.mxu0 0.0
    %2045 = vmatpush.xpose.msra.mxu0 0.0
    %2046 = vmatpush.xpose.msra.mxu0 %v228
    %2047 = vmatpush.xpose.msra.mxu0 %v132
    %2048 = vmatmul.f32.gmra.mxu0 %v373
    %v2049 = vpop.f32.mrf.mxu0
    %v2050 = vadd.f32 %v2030, %v2049
    %2051 = vdwg.mxu0
    %2052 = vmatpush.xpose.msra.mxu0 0.0
    %2053 = vmatpush.xpose.msra.mxu0 0.0
    %2054 = vmatpush.xpose.msra.mxu0 0.0
    %2055 = vmatpush.xpose.msra.mxu0 0.0
    %2056 = vmatpush.xpose.msra.mxu0 0.0
    %2057 = vmatpush.xpose.msra.mxu0 0.0
    %2058 = vmatpush.xpose.msra.mxu0 0.0
    %2059 = vmatpush.xpose.msra.mxu0 0.0
    %2060 = vmatpush.xpose.msra.mxu0 0.0
    %2061 = vmatpush.xpose.msra.mxu0 0.0
    %2062 = vmatpush.xpose.msra.mxu0 0.0
    %2063 = vmatpush.xpose.msra.mxu0 0.0
    %2064 = vmatpush.xpose.msra.mxu0 0.0
    %2065 = vmatpush.xpose.msra.mxu0 0.0
    %2066 = vmatpush.xpose.msra.mxu0 %v229
    %2067 = vmatpush.xpose.msra.mxu0 %v133
    %2068 = vmatmul.f32.gmra.mxu0 %v374
    %v2069 = vpop.f32.mrf.mxu0
    %v2070 = vadd.f32 %v2050, %v2069
    %2071 = vdwg.mxu0
    %2072 = vmatpush.xpose.msra.mxu0 0.0
    %2073 = vmatpush.xpose.msra.mxu0 0.0
    %2074 = vmatpush.xpose.msra.mxu0 0.0
    %2075 = vmatpush.xpose.msra.mxu0 0.0
    %2076 = vmatpush.xpose.msra.mxu0 0.0
    %2077 = vmatpush.xpose.msra.mxu0 0.0
    %2078 = vmatpush.xpose.msra.mxu0 0.0
    %2079 = vmatpush.xpose.msra.mxu0 0.0
    %2080 = vmatpush.xpose.msra.mxu0 0.0
    %2081 = vmatpush.xpose.msra.mxu0 0.0
    %2082 = vmatpush.xpose.msra.mxu0 0.0
    %2083 = vmatpush.xpose.msra.mxu0 0.0
    %2084 = vmatpush.xpose.msra.mxu0 0.0
    %2085 = vmatpush.xpose.msra.mxu0 0.0
    %2086 = vmatpush.xpose.msra.mxu0 %v230
    %2087 = vmatpush.xpose.msra.mxu0 %v134
    %2088 = vmatmul.f32.gmra.mxu0 %v375
    %v2089 = vpop.f32.mrf.mxu0
    %v2090 = vadd.f32 %v2070, %v2089
    %2091 = vdwg.mxu0
    %2092 = vmatpush.xpose.msra.mxu0 0.0
    %2093 = vmatpush.xpose.msra.mxu0 0.0
    %2094 = vmatpush.xpose.msra.mxu0 0.0
    %2095 = vmatpush.xpose.msra.mxu0 0.0
    %2096 = vmatpush.xpose.msra.mxu0 0.0
    %2097 = vmatpush.xpose.msra.mxu0 0.0
    %2098 = vmatpush.xpose.msra.mxu0 0.0
    %2099 = vmatpush.xpose.msra.mxu0 0.0
    %2100 = vmatpush.xpose.msra.mxu0 0.0
    %2101 = vmatpush.xpose.msra.mxu0 0.0
    %2102 = vmatpush.xpose.msra.mxu0 0.0
    %2103 = vmatpush.xpose.msra.mxu0 0.0
    %2104 = vmatpush.xpose.msra.mxu0 0.0
    %2105 = vmatpush.xpose.msra.mxu0 0.0
    %2106 = vmatpush.xpose.msra.mxu0 %v231
    %2107 = vmatpush.xpose.msra.mxu0 %v135
    %2108 = vmatmul.f32.gmra.mxu0 %v378
    %v2109 = vpop.f32.mrf.mxu0
    %v2110 = vadd.f32 %v2090, %v2109
    %2111 = vdwg.mxu0
    %2112 = vmatpush.xpose.msra.mxu0 0.0
    %2113 = vmatpush.xpose.msra.mxu0 0.0
    %2114 = vmatpush.xpose.msra.mxu0 0.0
    %2115 = vmatpush.xpose.msra.mxu0 0.0
    %2116 = vmatpush.xpose.msra.mxu0 0.0
    %2117 = vmatpush.xpose.msra.mxu0 0.0
    %2118 = vmatpush.xpose.msra.mxu0 0.0
    %2119 = vmatpush.xpose.msra.mxu0 0.0
    %2120 = vmatpush.xpose.msra.mxu0 0.0
    %2121 = vmatpush.xpose.msra.mxu0 0.0
    %2122 = vmatpush.xpose.msra.mxu0 0.0
    %2123 = vmatpush.xpose.msra.mxu0 0.0
    %2124 = vmatpush.xpose.msra.mxu0 0.0
    %2125 = vmatpush.xpose.msra.mxu0 0.0
    %2126 = vmatpush.xpose.msra.mxu0 %v232
    %2127 = vmatpush.xpose.msra.mxu0 %v136
    %2128 = vmatmul.f32.gmra.mxu0 %v379
    %v2129 = vpop.f32.mrf.mxu0
    %v2130 = vadd.f32 %v2110, %v2129
    %2131 = vdwg.mxu0
    %2132 = vmatpush.xpose.msra.mxu0 0.0
    %2133 = vmatpush.xpose.msra.mxu0 0.0
    %2134 = vmatpush.xpose.msra.mxu0 0.0
    %2135 = vmatpush.xpose.msra.mxu0 0.0
    %2136 = vmatpush.xpose.msra.mxu0 0.0
    %2137 = vmatpush.xpose.msra.mxu0 0.0
    %2138 = vmatpush.xpose.msra.mxu0 0.0
    %2139 = vmatpush.xpose.msra.mxu0 0.0
    %2140 = vmatpush.xpose.msra.mxu0 0.0
    %2141 = vmatpush.xpose.msra.mxu0 0.0
    %2142 = vmatpush.xpose.msra.mxu0 0.0
    %2143 = vmatpush.xpose.msra.mxu0 0.0
    %2144 = vmatpush.xpose.msra.mxu0 0.0
    %2145 = vmatpush.xpose.msra.mxu0 0.0
    %2146 = vmatpush.xpose.msra.mxu0 %v233
    %2147 = vmatpush.xpose.msra.mxu0 %v137
    %2148 = vmatmul.f32.gmra.mxu0 %v380
    %v2149 = vpop.f32.mrf.mxu0
    %v2150 = vadd.f32 %v2130, %v2149
    %2151 = vdwg.mxu0
    %2152 = vmatpush.xpose.msra.mxu0 0.0
    %2153 = vmatpush.xpose.msra.mxu0 0.0
    %2154 = vmatpush.xpose.msra.mxu0 0.0
    %2155 = vmatpush.xpose.msra.mxu0 0.0
    %2156 = vmatpush.xpose.msra.mxu0 0.0
    %2157 = vmatpush.xpose.msra.mxu0 0.0
    %2158 = vmatpush.xpose.msra.mxu0 0.0
    %2159 = vmatpush.xpose.msra.mxu0 0.0
    %2160 = vmatpush.xpose.msra.mxu0 0.0
    %2161 = vmatpush.xpose.msra.mxu0 0.0
    %2162 = vmatpush.xpose.msra.mxu0 0.0
    %2163 = vmatpush.xpose.msra.mxu0 0.0
    %2164 = vmatpush.xpose.msra.mxu0 0.0
    %2165 = vmatpush.xpose.msra.mxu0 0.0
    %2166 = vmatpush.xpose.msra.mxu0 %v234
    %2167 = vmatpush.xpose.msra.mxu0 %v138
    %2168 = vmatmul.f32.gmra.mxu0 %v381
    %v2169 = vpop.f32.mrf.mxu0
    %v2170 = vadd.f32 %v2150, %v2169
    %2171 = vdwg.mxu0
    %2172 = vmatpush.xpose.msra.mxu0 0.0
    %2173 = vmatpush.xpose.msra.mxu0 0.0
    %2174 = vmatpush.xpose.msra.mxu0 0.0
    %2175 = vmatpush.xpose.msra.mxu0 0.0
    %2176 = vmatpush.xpose.msra.mxu0 0.0
    %2177 = vmatpush.xpose.msra.mxu0 0.0
    %2178 = vmatpush.xpose.msra.mxu0 0.0
    %2179 = vmatpush.xpose.msra.mxu0 0.0
    %2180 = vmatpush.xpose.msra.mxu0 0.0
    %2181 = vmatpush.xpose.msra.mxu0 0.0
    %2182 = vmatpush.xpose.msra.mxu0 0.0
    %2183 = vmatpush.xpose.msra.mxu0 0.0
    %2184 = vmatpush.xpose.msra.mxu0 0.0
    %2185 = vmatpush.xpose.msra.mxu0 0.0
    %2186 = vmatpush.xpose.msra.mxu0 %v235
    %2187 = vmatpush.xpose.msra.mxu0 %v139
    %2188 = vmatmul.f32.gmra.mxu0 %v382
    %v2189 = vpop.f32.mrf.mxu0
    %v2190 = vadd.f32 %v2170, %v2189
    %2191 = vdwg.mxu0
    %2192 = vmatpush.xpose.msra.mxu0 0.0
    %2193 = vmatpush.xpose.msra.mxu0 0.0
    %2194 = vmatpush.xpose.msra.mxu0 0.0
    %2195 = vmatpush.xpose.msra.mxu0 0.0
    %2196 = vmatpush.xpose.msra.mxu0 0.0
    %2197 = vmatpush.xpose.msra.mxu0 0.0
    %2198 = vmatpush.xpose.msra.mxu0 0.0
    %2199 = vmatpush.xpose.msra.mxu0 0.0
    %2200 = vmatpush.xpose.msra.mxu0 0.0
    %2201 = vmatpush.xpose.msra.mxu0 0.0
    %2202 = vmatpush.xpose.msra.mxu0 0.0
    %2203 = vmatpush.xpose.msra.mxu0 0.0
    %2204 = vmatpush.xpose.msra.mxu0 0.0
    %2205 = vmatpush.xpose.msra.mxu0 0.0
    %2206 = vmatpush.xpose.msra.mxu0 %v236
    %2207 = vmatpush.xpose.msra.mxu0 %v140
    %2208 = vmatmul.f32.gmra.mxu0 %v383
    %v2209 = vpop.f32.mrf.mxu0
    %v2210 = vadd.f32 %v2190, %v2209
    %2211 = vdwg.mxu0
    %2212 = vmatpush.xpose.msra.mxu0 0.0
    %2213 = vmatpush.xpose.msra.mxu0 0.0
    %2214 = vmatpush.xpose.msra.mxu0 0.0
    %2215 = vmatpush.xpose.msra.mxu0 0.0
    %2216 = vmatpush.xpose.msra.mxu0 0.0
    %2217 = vmatpush.xpose.msra.mxu0 0.0
    %2218 = vmatpush.xpose.msra.mxu0 0.0
    %2219 = vmatpush.xpose.msra.mxu0 0.0
    %2220 = vmatpush.xpose.msra.mxu0 0.0
    %2221 = vmatpush.xpose.msra.mxu0 0.0
    %2222 = vmatpush.xpose.msra.mxu0 0.0
    %2223 = vmatpush.xpose.msra.mxu0 0.0
    %2224 = vmatpush.xpose.msra.mxu0 0.0
    %2225 = vmatpush.xpose.msra.mxu0 0.0
    %2226 = vmatpush.xpose.msra.mxu0 %v237
    %2227 = vmatpush.xpose.msra.mxu0 %v141
    %2228 = vmatmul.f32.gmra.mxu0 %v384
    %v2229 = vpop.f32.mrf.mxu0
    %v2230 = vadd.f32 %v2210, %v2229
    %2231 = vdwg.mxu0
    %2232 = vmatpush.xpose.msra.mxu0 0.0
    %2233 = vmatpush.xpose.msra.mxu0 0.0
    %2234 = vmatpush.xpose.msra.mxu0 0.0
    %2235 = vmatpush.xpose.msra.mxu0 0.0
    %2236 = vmatpush.xpose.msra.mxu0 0.0
    %2237 = vmatpush.xpose.msra.mxu0 0.0
    %2238 = vmatpush.xpose.msra.mxu0 0.0
    %2239 = vmatpush.xpose.msra.mxu0 0.0
    %2240 = vmatpush.xpose.msra.mxu0 0.0
    %2241 = vmatpush.xpose.msra.mxu0 0.0
    %2242 = vmatpush.xpose.msra.mxu0 0.0
    %2243 = vmatpush.xpose.msra.mxu0 0.0
    %2244 = vmatpush.xpose.msra.mxu0 0.0
    %2245 = vmatpush.xpose.msra.mxu0 0.0
    %2246 = vmatpush.xpose.msra.mxu0 %v238
    %2247 = vmatpush.xpose.msra.mxu0 %v142
    %2248 = vmatmul.f32.gmra.mxu0 %v385
    %v2249 = vpop.f32.mrf.mxu0
    %v2250 = vadd.f32 %v2230, %v2249
    %2251 = vdwg.mxu0
    %2252 = vmatpush.xpose.msra.mxu0 0.0
    %2253 = vmatpush.xpose.msra.mxu0 0.0
    %2254 = vmatpush.xpose.msra.mxu0 0.0
    %2255 = vmatpush.xpose.msra.mxu0 0.0
    %2256 = vmatpush.xpose.msra.mxu0 0.0
    %2257 = vmatpush.xpose.msra.mxu0 0.0
    %2258 = vmatpush.xpose.msra.mxu0 0.0
    %2259 = vmatpush.xpose.msra.mxu0 0.0
    %2260 = vmatpush.xpose.msra.mxu0 0.0
    %2261 = vmatpush.xpose.msra.mxu0 0.0
    %2262 = vmatpush.xpose.msra.mxu0 0.0
    %2263 = vmatpush.xpose.msra.mxu0 0.0
    %2264 = vmatpush.xpose.msra.mxu0 0.0
    %2265 = vmatpush.xpose.msra.mxu0 0.0
    %2266 = vmatpush.xpose.msra.mxu0 %v239
    %2267 = vmatpush.xpose.msra.mxu0 %v143
    %2268 = vmatmul.f32.gmra.mxu0 %v388
    %v2269 = vpop.f32.mrf.mxu0
    %v2270 = vadd.f32 %v2250, %v2269
    %2271 = vdwg.mxu0
    %2272 = vmatpush.xpose.msra.mxu0 0.0
    %2273 = vmatpush.xpose.msra.mxu0 0.0
    %2274 = vmatpush.xpose.msra.mxu0 0.0
    %2275 = vmatpush.xpose.msra.mxu0 0.0
    %2276 = vmatpush.xpose.msra.mxu0 0.0
    %2277 = vmatpush.xpose.msra.mxu0 0.0
    %2278 = vmatpush.xpose.msra.mxu0 0.0
    %2279 = vmatpush.xpose.msra.mxu0 0.0
    %2280 = vmatpush.xpose.msra.mxu0 0.0
    %2281 = vmatpush.xpose.msra.mxu0 0.0
    %2282 = vmatpush.xpose.msra.mxu0 0.0
    %2283 = vmatpush.xpose.msra.mxu0 0.0
    %2284 = vmatpush.xpose.msra.mxu0 0.0
    %2285 = vmatpush.xpose.msra.mxu0 0.0
    %2286 = vmatpush.xpose.msra.mxu0 %v240
    %2287 = vmatpush.xpose.msra.mxu0 %v144
    %2288 = vmatmul.f32.gmra.mxu0 %v389
    %v2289 = vpop.f32.mrf.mxu0
    %v2290 = vadd.f32 %v2270, %v2289
    %2291 = vdwg.mxu0
    %2292 = vmatpush.xpose.msra.mxu0 0.0
    %2293 = vmatpush.xpose.msra.mxu0 0.0
    %2294 = vmatpush.xpose.msra.mxu0 0.0
    %2295 = vmatpush.xpose.msra.mxu0 0.0
    %2296 = vmatpush.xpose.msra.mxu0 0.0
    %2297 = vmatpush.xpose.msra.mxu0 0.0
    %2298 = vmatpush.xpose.msra.mxu0 0.0
    %2299 = vmatpush.xpose.msra.mxu0 0.0
    %2300 = vmatpush.xpose.msra.mxu0 0.0
    %2301 = vmatpush.xpose.msra.mxu0 0.0
    %2302 = vmatpush.xpose.msra.mxu0 0.0
    %2303 = vmatpush.xpose.msra.mxu0 0.0
    %2304 = vmatpush.xpose.msra.mxu0 0.0
    %2305 = vmatpush.xpose.msra.mxu0 0.0
    %2306 = vmatpush.xpose.msra.mxu0 %v241
    %2307 = vmatpush.xpose.msra.mxu0 %v145
    %2308 = vmatmul.f32.gmra.mxu0 %v390
    %v2309 = vpop.f32.mrf.mxu0
    %v2310 = vadd.f32 %v2290, %v2309
    %2311 = vdwg.mxu0
    %2312 = vmatpush.xpose.msra.mxu0 0.0
    %2313 = vmatpush.xpose.msra.mxu0 0.0
    %2314 = vmatpush.xpose.msra.mxu0 0.0
    %2315 = vmatpush.xpose.msra.mxu0 0.0
    %2316 = vmatpush.xpose.msra.mxu0 0.0
    %2317 = vmatpush.xpose.msra.mxu0 0.0
    %2318 = vmatpush.xpose.msra.mxu0 0.0
    %2319 = vmatpush.xpose.msra.mxu0 0.0
    %2320 = vmatpush.xpose.msra.mxu0 0.0
    %2321 = vmatpush.xpose.msra.mxu0 0.0
    %2322 = vmatpush.xpose.msra.mxu0 0.0
    %2323 = vmatpush.xpose.msra.mxu0 0.0
    %2324 = vmatpush.xpose.msra.mxu0 0.0
    %2325 = vmatpush.xpose.msra.mxu0 0.0
    %2326 = vmatpush.xpose.msra.mxu0 %v242
    %2327 = vmatpush.xpose.msra.mxu0 %v146
    %2328 = vmatmul.f32.gmra.mxu0 %v391
    %v2329 = vpop.f32.mrf.mxu0
    %v2330 = vadd.f32 %v2310, %v2329
    %2331 = vdwg.mxu0
    %2332 = vmatpush.xpose.msra.mxu0 0.0
    %2333 = vmatpush.xpose.msra.mxu0 0.0
    %2334 = vmatpush.xpose.msra.mxu0 0.0
    %2335 = vmatpush.xpose.msra.mxu0 0.0
    %2336 = vmatpush.xpose.msra.mxu0 0.0
    %2337 = vmatpush.xpose.msra.mxu0 0.0
    %2338 = vmatpush.xpose.msra.mxu0 0.0
    %2339 = vmatpush.xpose.msra.mxu0 0.0
    %2340 = vmatpush.xpose.msra.mxu0 0.0
    %2341 = vmatpush.xpose.msra.mxu0 0.0
    %2342 = vmatpush.xpose.msra.mxu0 0.0
    %2343 = vmatpush.xpose.msra.mxu0 0.0
    %2344 = vmatpush.xpose.msra.mxu0 0.0
    %2345 = vmatpush.xpose.msra.mxu0 0.0
    %2346 = vmatpush.xpose.msra.mxu0 %v243
    %2347 = vmatpush.xpose.msra.mxu0 %v147
    %2348 = vmatmul.f32.gmra.mxu0 %v392
    %v2349 = vpop.f32.mrf.mxu0
    %v2350 = vadd.f32 %v2330, %v2349
    %2351 = vdwg.mxu0
    %2352 = vmatpush.xpose.msra.mxu0 0.0
    %2353 = vmatpush.xpose.msra.mxu0 0.0
    %2354 = vmatpush.xpose.msra.mxu0 0.0
    %2355 = vmatpush.xpose.msra.mxu0 0.0
    %2356 = vmatpush.xpose.msra.mxu0 0.0
    %2357 = vmatpush.xpose.msra.mxu0 0.0
    %2358 = vmatpush.xpose.msra.mxu0 0.0
    %2359 = vmatpush.xpose.msra.mxu0 0.0
    %2360 = vmatpush.xpose.msra.mxu0 0.0
    %2361 = vmatpush.xpose.msra.mxu0 0.0
    %2362 = vmatpush.xpose.msra.mxu0 0.0
    %2363 = vmatpush.xpose.msra.mxu0 0.0
    %2364 = vmatpush.xpose.msra.mxu0 0.0
    %2365 = vmatpush.xpose.msra.mxu0 0.0
    %2366 = vmatpush.xpose.msra.mxu0 %v244
    %2367 = vmatpush.xpose.msra.mxu0 %v148
    %2368 = vmatmul.f32.gmra.mxu0 %v393
    %v2369 = vpop.f32.mrf.mxu0
    %v2370 = vadd.f32 %v2350, %v2369
    %2371 = vdwg.mxu0
    %2372 = vmatpush.xpose.msra.mxu0 0.0
    %2373 = vmatpush.xpose.msra.mxu0 0.0
    %2374 = vmatpush.xpose.msra.mxu0 0.0
    %2375 = vmatpush.xpose.msra.mxu0 0.0
    %2376 = vmatpush.xpose.msra.mxu0 0.0
    %2377 = vmatpush.xpose.msra.mxu0 0.0
    %2378 = vmatpush.xpose.msra.mxu0 0.0
    %2379 = vmatpush.xpose.msra.mxu0 0.0
    %2380 = vmatpush.xpose.msra.mxu0 0.0
    %2381 = vmatpush.xpose.msra.mxu0 0.0
    %2382 = vmatpush.xpose.msra.mxu0 0.0
    %2383 = vmatpush.xpose.msra.mxu0 0.0
    %2384 = vmatpush.xpose.msra.mxu0 0.0
    %2385 = vmatpush.xpose.msra.mxu0 0.0
    %2386 = vmatpush.xpose.msra.mxu0 %v245
    %2387 = vmatpush.xpose.msra.mxu0 %v149
    %2388 = vmatmul.f32.gmra.mxu0 %v394
    %v2389 = vpop.f32.mrf.mxu0
    %v2390 = vadd.f32 %v2370, %v2389
    %2391 = vdwg.mxu0
    %2392 = vmatpush.xpose.msra.mxu0 0.0
    %2393 = vmatpush.xpose.msra.mxu0 0.0
    %2394 = vmatpush.xpose.msra.mxu0 0.0
    %2395 = vmatpush.xpose.msra.mxu0 0.0
    %2396 = vmatpush.xpose.msra.mxu0 0.0
    %2397 = vmatpush.xpose.msra.mxu0 0.0
    %2398 = vmatpush.xpose.msra.mxu0 0.0
    %2399 = vmatpush.xpose.msra.mxu0 0.0
    %2400 = vmatpush.xpose.msra.mxu0 0.0
    %2401 = vmatpush.xpose.msra.mxu0 0.0
    %2402 = vmatpush.xpose.msra.mxu0 0.0
    %2403 = vmatpush.xpose.msra.mxu0 0.0
    %2404 = vmatpush.xpose.msra.mxu0 0.0
    %2405 = vmatpush.xpose.msra.mxu0 0.0
    %2406 = vmatpush.xpose.msra.mxu0 %v246
    %2407 = vmatpush.xpose.msra.mxu0 %v150
    %2408 = vmatmul.f32.gmra.mxu0 %v395
    %v2409 = vpop.f32.mrf.mxu0
    %v2410 = vadd.f32 %v2390, %v2409
    %2411 = vdwg.mxu0
    %vm2412 = vcmask 74752
    %2413 = vst.msk [vmem:[#allocation5] sm:$0x3] %vm2412, %v2410
    // Predicated region
    $region18: #{mobilenet_v2_forward.1} parent=1 // pred_check
      _
    $region19: #{mobilenet_v2_forward.1} parent=1 // pred_check_branch
      %2415 = sbr.rel (0) target = $region21
    $region20: #{mobilenet_v2_forward.1} parent=1 // pred_region
      %2417 = vsyncadd [#allocation4], 0
      %s2419 = sshll.u32 [#allocation5], 4
      %s2420 = int_to_ptr.vmem [resolvable:$true] %s2419
      %s2421 = sshll.u32 %s3, 4
      %s2422 = int_to_ptr.hbm [resolvable:$true] %s2421
      %2424 = dma.vmem_to_hbm [thread:$0]  %s2420, 32, %s2422, [#allocation4]
    $region21: #{mobilenet_v2_forward.1} parent=1 // pred_fallthru
      _
    // Predicated region
    $region22: #{mobilenet_v2_forward.1} parent=1 // pred_check
      _
    $region23: #{mobilenet_v2_forward.1} parent=1 // pred_check_branch
      %2426 = sbr.rel (0) target = $region25
    $region24: #{mobilenet_v2_forward.1} parent=1 // pred_region
      %2428 = dma.done [#allocation4], 32
    $region25: #{mobilenet_v2_forward.1} parent=1 // pred_fallthru
      _
    %2429 = vsyncpa [#allocation3], 1
    %2430 = vsyncpa [#allocation4], 1

</llo_original>
